<compile_context>
chip_gen: v7x
topology: tpu7x:2x2x1
jax: 0.10.0
libtpu: 0.0.40
codegen_flags: <defaults>
</compile_context>

<pallas_src>
import math
import jax
import jax.numpy as jnp
from jax.experimental import pallas as pl
from jax.experimental.pallas import tpu as pltpu


def _lstm_recurrence_kernel(xw_ref, u_ref, hseq_ref, h_out_ref, c_out_ref,
                            h_sc, c_sc):
    """One grid step = one (batch block, time chunk).

    xw_ref:   (T_CHUNK, B_BLOCK, 4*HSP)  precomputed x@W + bias (gate-padded)
    u_ref:    (HSP, 4*HSP)               recurrent weight (gate-padded)
    hseq_ref: (T_CHUNK, B_BLOCK, HSP)    hidden states for this chunk
    h_out_ref/c_out_ref: (B_BLOCK, HSP)  final states (resident over time axis)
    h_sc/c_sc: (B_BLOCK, HSP)            VMEM carry across time chunks
    """
    t_blk = pl.program_id(1)
    HSP = h_sc.shape[-1]
    T_CHUNK = xw_ref.shape[0]

    # init_states=None path: zero the carry at the start of each batch block.
    @pl.when(t_blk == 0)
    def _():
        h_sc[...] = jnp.zeros_like(h_sc)
        c_sc[...] = jnp.zeros_like(c_sc)

    u = u_ref[...]  # hoist the weight load out of the unrolled time loop

    def step(tt, carry):
        h, c = carry
        # Only the recurrent matmul lives in the loop; x@W + bias was hoisted.
        gates = xw_ref[tt] + jnp.dot(h, u, preferred_element_type=jnp.float32)
        # One fused sigmoid over all four gates (single EUP stream), then
        # lane-aligned slices (HSP is a multiple of 128).
        sig = jax.nn.sigmoid(gates)
        i_t = sig[:, 0 * HSP:1 * HSP]
        f_t = sig[:, 1 * HSP:2 * HSP]
        g_t = sig[:, 2 * HSP:3 * HSP]   # reference uses sigmoid (not tanh) here
        o_t = sig[:, 3 * HSP:4 * HSP]
        c_new = f_t * c + i_t * g_t
        h_new = o_t * jnp.tanh(c_new)
        hseq_ref[tt] = h_new.astype(hseq_ref.dtype)
        return h_new, c_new

    h_f, c_f = jax.lax.fori_loop(0, T_CHUNK, step, (h_sc[...], c_sc[...]),
                                 unroll=True)
    h_sc[...] = h_f
    c_sc[...] = c_f

    # Final-state outputs are resident across the time axis; write them only
    # on the last chunk (the value written then is what gets flushed to HBM).
    @pl.when(t_blk == pl.num_programs(1) - 1)
    def _():
        h_out_ref[...] = h_f.astype(h_out_ref.dtype)
        c_out_ref[...] = c_f.astype(c_out_ref.dtype)


def _round_up(x, m):
    return (x + m - 1) // m * m


def custom_lstm(x, W, U, bias):
    """x: (batch, seq, input_sz) f32. Returns (hidden_seq, (h_T, c_T)),
    matching CustomLSTM.forward with init_states=None."""
    bs, seq_sz, input_sz = x.shape
    HS = U.shape[0]
    assert W.shape == (input_sz, 4 * HS)
    assert bias.shape == (4 * HS,)

    # Lane/sublane-aligned padded sizes.
    HSP = _round_up(HS, 128)                 # per-gate stride, lane-aligned
    if bs > 128:
        B_BLOCK = 128
        BSP = _round_up(bs, B_BLOCK)
    else:
        BSP = _round_up(bs, 8)
        B_BLOCK = BSP
    n_b = BSP // B_BLOCK

    # Time chunk: largest of these that divides seq (amortizes grid overhead).
    T_CHUNK = 1
    for cand in (16, 8, 4, 2):
        if seq_sz % cand == 0:
            T_CHUNK = cand
            break
    n_t = seq_sz // T_CHUNK

    # ---- Hoisted input projection: one big matmul over all seq*batch rows,
    #      bias folded in (no per-step broadcast inside the kernel). ---------
    xw = jnp.einsum("bsi,ig->bsg", x, W,
                    preferred_element_type=jnp.float32) + bias   # (bs, seq, 4HS)
    xw = jnp.transpose(xw, (1, 0, 2))                            # time-major

    # ---- Repack to the padded gate layout: gate k occupies columns
    #      [k*HSP, k*HSP + HS). Padded rows/cols are zero and inert
    #      (padded rows of U are zero, so padded h columns never feed back). --
    xw_pad = jnp.pad(xw.reshape(seq_sz, bs, 4, HS),
                     ((0, 0), (0, BSP - bs), (0, 0), (0, HSP - HS)))
    xw_pad = xw_pad.reshape(seq_sz, BSP, 4 * HSP)
    u_pad = jnp.pad(U.reshape(HS, 4, HS),
                    ((0, HSP - HS), (0, 0), (0, HSP - HS)))
    u_pad = u_pad.reshape(HSP, 4 * HSP)

    out_shapes = (
        jax.ShapeDtypeStruct((seq_sz, BSP, HSP), x.dtype),   # hidden_seq (t-major)
        jax.ShapeDtypeStruct((BSP, HSP), x.dtype),           # h_T
        jax.ShapeDtypeStruct((BSP, HSP), x.dtype),           # c_T
    )

    grid_spec = pltpu.PrefetchScalarGridSpec(
        num_scalar_prefetch=0,
        grid=(n_b, n_t),
        in_specs=[
            # Precomputed x@W+bias tile for this (batch block, time chunk).
            pl.BlockSpec((T_CHUNK, B_BLOCK, 4 * HSP), lambda b, t: (t, b, 0)),
            # Recurrent weight: grid-invariant (constant index_map -> one DMA).
            pl.BlockSpec((HSP, 4 * HSP), lambda b, t: (0, 0)),
        ],
        out_specs=[
            pl.BlockSpec((T_CHUNK, B_BLOCK, HSP), lambda b, t: (t, b, 0)),
            pl.BlockSpec((B_BLOCK, HSP), lambda b, t: (b, 0)),   # resident over t
            pl.BlockSpec((B_BLOCK, HSP), lambda b, t: (b, 0)),   # resident over t
        ],
        scratch_shapes=[
            pltpu.VMEM((B_BLOCK, HSP), jnp.float32),   # h carry
            pltpu.VMEM((B_BLOCK, HSP), jnp.float32),   # c carry
        ],
    )

    hseq_pad, h_pad, c_pad = pl.pallas_call(
        _lstm_recurrence_kernel,
        out_shape=out_shapes,
        grid_spec=grid_spec,
        compiler_params=pltpu.CompilerParams(
            dimension_semantics=("parallel", "arbitrary")),
    )(xw_pad, u_pad)

    hidden_seq = jnp.transpose(hseq_pad[:, :bs, :HS], (1, 0, 2))  # (bs, seq, HS)
    return hidden_seq, (h_pad[:bs, :HS], c_pad[:bs, :HS])


def _lstm_reference(x, W, U, bias):
    """Plain-JAX replica of the PyTorch forward, for verification."""
    bs, seq_sz, _ = x.shape
    HS = U.shape[0]
    h_t = jnp.zeros((bs, HS), jnp.float32)
    c_t = jnp.zeros((bs, HS), jnp.float32)
    hs = []
    for t in range(seq_sz):
        gates = x[:, t, :] @ W + h_t @ U + bias
        i_t = jax.nn.sigmoid(gates[:, :HS])
        f_t = jax.nn.sigmoid(gates[:, HS:2 * HS])
        g_t = jax.nn.sigmoid(gates[:, 2 * HS:3 * HS])
        o_t = jax.nn.sigmoid(gates[:, 3 * HS:4 * HS])
        c_t = f_t * c_t + i_t * g_t
        h_t = o_t * jnp.tanh(c_t)
        hs.append(h_t)
    return jnp.stack(hs, axis=1), (h_t, c_t)


if __name__ == "__main__":
    # Small shapes: batch=2, seq=8, input_sz=16, hidden_sz=32
    batch, seq, input_sz, hidden_sz = 2, 8, 16, 32

    key = jax.random.PRNGKey(0)
    kx, kw, ku, kb = jax.random.split(key, 4)

    # Deterministic init matching nn.Module: uniform(-stdv, stdv), stdv=1/sqrt(HS)
    stdv = 1.0 / math.sqrt(hidden_sz)
    W = jax.random.uniform(kw, (input_sz, 4 * hidden_sz), jnp.float32, -stdv, stdv)
    U = jax.random.uniform(ku, (hidden_sz, 4 * hidden_sz), jnp.float32, -stdv, stdv)
    bias = jax.random.uniform(kb, (4 * hidden_sz,), jnp.float32, -stdv, stdv)

    x = jax.random.normal(kx, (batch, seq, input_sz), jnp.float32)

    hidden_seq, (h_T, c_T) = jax.jit(custom_lstm)(x, W, U, bias)
    jax.block_until_ready((hidden_seq, h_T, c_T))

    # Sanity check against a pure-JAX reference
    ref_seq, (ref_h, ref_c) = _lstm_reference(x, W, U, bias)
    assert hidden_seq.shape == (batch, seq, hidden_sz)
    assert jnp.allclose(hidden_seq, ref_seq, atol=1e-5), "hidden_seq mismatch"
    assert jnp.allclose(h_T, ref_h, atol=1e-5), "h_T mismatch"
    assert jnp.allclose(c_T, ref_c, atol=1e-5), "c_T mismatch"

    print("KERNEL_OK")
</pallas_src>

<mosaic_0001>
module attributes {stable_mosaic.version = 11 : i64} {
  func.func @_lstm_recurrence_kernel(%arg0: i32, %arg1: i32, %arg2: memref<8x8x512xf32, #tpu.memory_space<vmem>>, %arg3: memref<128x512xf32, #tpu.memory_space<vmem>>, %arg4: memref<8x8x128xf32, #tpu.memory_space<vmem>>, %arg5: memref<8x128xf32, #tpu.memory_space<vmem>>, %arg6: memref<8x128xf32, #tpu.memory_space<vmem>>, %arg7: memref<8x128xf32, #tpu.memory_space<vmem>>, %arg8: memref<8x128xf32, #tpu.memory_space<vmem>>) attributes {dimension_semantics = [#tpu.dimension_semantics<parallel>, #tpu.dimension_semantics<arbitrary>], iteration_bounds = array<i64: 1, 1>, scalar_prefetch = 0 : i64, scratch_operands = 2 : i64, tpu.core_type = #tpu.core_type<tc>, window_params = [{transform_indices = @transform_0, window_bounds = array<i64: 8, 8, 512>}, {pipeline_mode = #tpu.pipeline_mode<synchronous>, transform_indices = @transform_1, window_bounds = array<i64: 128, 512>}, {transform_indices = @transform_2, window_bounds = array<i64: 8, 8, 128>}, {transform_indices = @transform_3, window_bounds = array<i64: 8, 128>}, {transform_indices = @transform_4, window_bounds = array<i64: 8, 128>}]} {
    %c0_i32 = arith.constant 0 : i32
    %0 = arith.cmpi eq, %arg1, %c0_i32 : i32
    %1 = arith.extui %0 : i1 to i32
    %c0_i32_0 = arith.constant 0 : i32
    %2 = arith.cmpi ne, %1, %c0_i32_0 : i32
    scf.if %2 {
      %cst_60 = arith.constant 0.000000e+00 : f32
      %195 = vector.broadcast %cst_60 : f32 to vector<8x128xf32>
      %c0_61 = arith.constant 0 : index
      %c0_62 = arith.constant 0 : index
      %196 = vector.load %arg7[%c0_61, %c0_62] : memref<8x128xf32, #tpu.memory_space<vmem>>, vector<8x128xf32>
      tpu.vector_store %arg7[%c0_61, %c0_62], %195 {strides = array<i32>} : memref<8x128xf32, #tpu.memory_space<vmem>>, vector<8x128xf32>,
      %cst_63 = arith.constant 0.000000e+00 : f32
      %197 = vector.broadcast %cst_63 : f32 to vector<8x128xf32>
      %c0_64 = arith.constant 0 : index
      %c0_65 = arith.constant 0 : index
      %198 = vector.load %arg8[%c0_64, %c0_65] : memref<8x128xf32, #tpu.memory_space<vmem>>, vector<8x128xf32>
      tpu.vector_store %arg8[%c0_64, %c0_65], %197 {strides = array<i32>} : memref<8x128xf32, #tpu.memory_space<vmem>>, vector<8x128xf32>,
    } else {
    }
    %c0 = arith.constant 0 : index
    %c0_1 = arith.constant 0 : index
    %3 = vector.load %arg3[%c0, %c0_1] : memref<128x512xf32, #tpu.memory_space<vmem>>, vector<128x512xf32>
    %c0_2 = arith.constant 0 : index
    %c0_3 = arith.constant 0 : index
    %4 = vector.load %arg7[%c0_2, %c0_3] : memref<8x128xf32, #tpu.memory_space<vmem>>, vector<8x128xf32>
    %c0_4 = arith.constant 0 : index
    %c0_5 = arith.constant 0 : index
    %5 = vector.load %arg8[%c0_4, %c0_5] : memref<8x128xf32, #tpu.memory_space<vmem>>, vector<8x128xf32>
    %c0_i32_6 = arith.constant 0 : i32
    %6 = arith.index_cast %c0_i32_6 : i32 to index
    %c0_7 = arith.constant 0 : index
    %c0_8 = arith.constant 0 : index
    %7 = vector.load %arg2[%6, %c0_7, %c0_8] : memref<8x8x512xf32, #tpu.memory_space<vmem>>, vector<1x8x512xf32>
    %8 = vector.shape_cast %7 : vector<1x8x512xf32> to vector<8x512xf32>
    %cst = arith.constant dense<0.000000e+00> : vector<8x512xf32>
    %9 = tpu.matmul %4, %3, %cst {dimension_numbers = #tpu.dot_dimension_numbers<[1], [0], [0], [1], [0, 0, 1, 1], [], []>} : vector<8x128xf32>, vector<128x512xf32>, vector<8x512xf32> -> vector<8x512xf32>
    %10 = arith.addf %8, %9 : vector<8x512xf32>
    %11 = arith.negf %10 : vector<8x512xf32>
    %12 = math.exp %11 : vector<8x512xf32>
    %cst_9 = arith.constant 1.000000e+00 : f32
    %13 = vector.broadcast %cst_9 : f32 to vector<8x512xf32>
    %14 = arith.addf %13, %12 : vector<8x512xf32>
    %15 = arith.divf %13, %14 : vector<8x512xf32>
    %16 = vector.extract_strided_slice %15 {offsets = [0, 0], sizes = [8, 128], strides = [1, 1]} : vector<8x512xf32> to vector<8x128xf32>
    %17 = vector.extract_strided_slice %15 {offsets = [0, 128], sizes = [8, 128], strides = [1, 1]} : vector<8x512xf32> to vector<8x128xf32>
    %18 = vector.extract_strided_slice %15 {offsets = [0, 256], sizes = [8, 128], strides = [1, 1]} : vector<8x512xf32> to vector<8x128xf32>
    %19 = vector.extract_strided_slice %15 {offsets = [0, 384], sizes = [8, 128], strides = [1, 1]} : vector<8x512xf32> to vector<8x128xf32>
    %20 = arith.mulf %17, %5 : vector<8x128xf32>
    %21 = arith.mulf %16, %18 : vector<8x128xf32>
    %22 = arith.addf %20, %21 : vector<8x128xf32>
    %23 = math.tanh %22 : vector<8x128xf32>
    %24 = arith.mulf %19, %23 : vector<8x128xf32>
    %25 = arith.index_cast %c0_i32_6 : i32 to index
    %c0_10 = arith.constant 0 : index
    %c0_11 = arith.constant 0 : index
    %26 = vector.load %arg4[%25, %c0_10, %c0_11] : memref<8x8x128xf32, #tpu.memory_space<vmem>>, vector<1x8x128xf32>
    %27 = vector.shape_cast %26 : vector<1x8x128xf32> to vector<8x128xf32>
    %28 = vector.shape_cast %24 : vector<8x128xf32> to vector<1x8x128xf32>
    tpu.vector_store %arg4[%25, %c0_10, %c0_11], %28 {strides = array<i32>} : memref<8x8x128xf32, #tpu.memory_space<vmem>>, vector<1x8x128xf32>,
    %c1_i32 = arith.constant 1 : i32
    %29 = arith.index_cast %c1_i32 : i32 to index
    %c0_12 = arith.constant 0 : index
    %c0_13 = arith.constant 0 : index
    %30 = vector.load %arg2[%29, %c0_12, %c0_13] : memref<8x8x512xf32, #tpu.memory_space<vmem>>, vector<1x8x512xf32>
    %31 = vector.shape_cast %30 : vector<1x8x512xf32> to vector<8x512xf32>
    %cst_14 = arith.constant dense<0.000000e+00> : vector<8x512xf32>
    %32 = tpu.matmul %24, %3, %cst_14 {dimension_numbers = #tpu.dot_dimension_numbers<[1], [0], [0], [1], [0, 0, 1, 1], [], []>} : vector<8x128xf32>, vector<128x512xf32>, vector<8x512xf32> -> vector<8x512xf32>
    %33 = arith.addf %31, %32 : vector<8x512xf32>
    %34 = arith.negf %33 : vector<8x512xf32>
    %35 = math.exp %34 : vector<8x512xf32>
    %cst_15 = arith.constant 1.000000e+00 : f32
    %36 = vector.broadcast %cst_15 : f32 to vector<8x512xf32>
    %37 = arith.addf %36, %35 : vector<8x512xf32>
    %38 = arith.divf %36, %37 : vector<8x512xf32>
    %39 = vector.extract_strided_slice %38 {offsets = [0, 0], sizes = [8, 128], strides = [1, 1]} : vector<8x512xf32> to vector<8x128xf32>
    %40 = vector.extract_strided_slice %38 {offsets = [0, 128], sizes = [8, 128], strides = [1, 1]} : vector<8x512xf32> to vector<8x128xf32>
    %41 = vector.extract_strided_slice %38 {offsets = [0, 256], sizes = [8, 128], strides = [1, 1]} : vector<8x512xf32> to vector<8x128xf32>
    %42 = vector.extract_strided_slice %38 {offsets = [0, 384], sizes = [8, 128], strides = [1, 1]} : vector<8x512xf32> to vector<8x128xf32>
    %43 = arith.mulf %40, %22 : vector<8x128xf32>
    %44 = arith.mulf %39, %41 : vector<8x128xf32>
    %45 = arith.addf %43, %44 : vector<8x128xf32>
    %46 = math.tanh %45 : vector<8x128xf32>
    %47 = arith.mulf %42, %46 : vector<8x128xf32>
    %48 = arith.index_cast %c1_i32 : i32 to index
    %c0_16 = arith.constant 0 : index
    %c0_17 = arith.constant 0 : index
    %49 = vector.load %arg4[%48, %c0_16, %c0_17] : memref<8x8x128xf32, #tpu.memory_space<vmem>>, vector<1x8x128xf32>
    %50 = vector.shape_cast %49 : vector<1x8x128xf32> to vector<8x128xf32>
    %51 = vector.shape_cast %47 : vector<8x128xf32> to vector<1x8x128xf32>
    tpu.vector_store %arg4[%48, %c0_16, %c0_17], %51 {strides = array<i32>} : memref<8x8x128xf32, #tpu.memory_space<vmem>>, vector<1x8x128xf32>,
    %c2_i32 = arith.constant 2 : i32
    %52 = arith.index_cast %c2_i32 : i32 to index
    %c0_18 = arith.constant 0 : index
    %c0_19 = arith.constant 0 : index
    %53 = vector.load %arg2[%52, %c0_18, %c0_19] : memref<8x8x512xf32, #tpu.memory_space<vmem>>, vector<1x8x512xf32>
    %54 = vector.shape_cast %53 : vector<1x8x512xf32> to vector<8x512xf32>
    %cst_20 = arith.constant dense<0.000000e+00> : vector<8x512xf32>
    %55 = tpu.matmul %47, %3, %cst_20 {dimension_numbers = #tpu.dot_dimension_numbers<[1], [0], [0], [1], [0, 0, 1, 1], [], []>} : vector<8x128xf32>, vector<128x512xf32>, vector<8x512xf32> -> vector<8x512xf32>
    %56 = arith.addf %54, %55 : vector<8x512xf32>
    %57 = arith.negf %56 : vector<8x512xf32>
    %58 = math.exp %57 : vector<8x512xf32>
    %cst_21 = arith.constant 1.000000e+00 : f32
    %59 = vector.broadcast %cst_21 : f32 to vector<8x512xf32>
    %60 = arith.addf %59, %58 : vector<8x512xf32>
    %61 = arith.divf %59, %60 : vector<8x512xf32>
    %62 = vector.extract_strided_slice %61 {offsets = [0, 0], sizes = [8, 128], strides = [1, 1]} : vector<8x512xf32> to vector<8x128xf32>
    %63 = vector.extract_strided_slice %61 {offsets = [0, 128], sizes = [8, 128], strides = [1, 1]} : vector<8x512xf32> to vector<8x128xf32>
    %64 = vector.extract_strided_slice %61 {offsets = [0, 256], sizes = [8, 128], strides = [1, 1]} : vector<8x512xf32> to vector<8x128xf32>
    %65 = vector.extract_strided_slice %61 {offsets = [0, 384], sizes = [8, 128], strides = [1, 1]} : vector<8x512xf32> to vector<8x128xf32>
    %66 = arith.mulf %63, %45 : vector<8x128xf32>
    %67 = arith.mulf %62, %64 : vector<8x128xf32>
    %68 = arith.addf %66, %67 : vector<8x128xf32>
    %69 = math.tanh %68 : vector<8x128xf32>
    %70 = arith.mulf %65, %69 : vector<8x128xf32>
    %71 = arith.index_cast %c2_i32 : i32 to index
    %c0_22 = arith.constant 0 : index
    %c0_23 = arith.constant 0 : index
    %72 = vector.load %arg4[%71, %c0_22, %c0_23] : memref<8x8x128xf32, #tpu.memory_space<vmem>>, vector<1x8x128xf32>
    %73 = vector.shape_cast %72 : vector<1x8x128xf32> to vector<8x128xf32>
    %74 = vector.shape_cast %70 : vector<8x128xf32> to vector<1x8x128xf32>
    tpu.vector_store %arg4[%71, %c0_22, %c0_23], %74 {strides = array<i32>} : memref<8x8x128xf32, #tpu.memory_space<vmem>>, vector<1x8x128xf32>,
    %c3_i32 = arith.constant 3 : i32
    %75 = arith.index_cast %c3_i32 : i32 to index
    %c0_24 = arith.constant 0 : index
    %c0_25 = arith.constant 0 : index
    %76 = vector.load %arg2[%75, %c0_24, %c0_25] : memref<8x8x512xf32, #tpu.memory_space<vmem>>, vector<1x8x512xf32>
    %77 = vector.shape_cast %76 : vector<1x8x512xf32> to vector<8x512xf32>
    %cst_26 = arith.constant dense<0.000000e+00> : vector<8x512xf32>
    %78 = tpu.matmul %70, %3, %cst_26 {dimension_numbers = #tpu.dot_dimension_numbers<[1], [0], [0], [1], [0, 0, 1, 1], [], []>} : vector<8x128xf32>, vector<128x512xf32>, vector<8x512xf32> -> vector<8x512xf32>
    %79 = arith.addf %77, %78 : vector<8x512xf32>
    %80 = arith.negf %79 : vector<8x512xf32>
    %81 = math.exp %80 : vector<8x512xf32>
    %cst_27 = arith.constant 1.000000e+00 : f32
    %82 = vector.broadcast %cst_27 : f32 to vector<8x512xf32>
    %83 = arith.addf %82, %81 : vector<8x512xf32>
    %84 = arith.divf %82, %83 : vector<8x512xf32>
    %85 = vector.extract_strided_slice %84 {offsets = [0, 0], sizes = [8, 128], strides = [1, 1]} : vector<8x512xf32> to vector<8x128xf32>
    %86 = vector.extract_strided_slice %84 {offsets = [0, 128], sizes = [8, 128], strides = [1, 1]} : vector<8x512xf32> to vector<8x128xf32>
    %87 = vector.extract_strided_slice %84 {offsets = [0, 256], sizes = [8, 128], strides = [1, 1]} : vector<8x512xf32> to vector<8x128xf32>
    %88 = vector.extract_strided_slice %84 {offsets = [0, 384], sizes = [8, 128], strides = [1, 1]} : vector<8x512xf32> to vector<8x128xf32>
    %89 = arith.mulf %86, %68 : vector<8x128xf32>
    %90 = arith.mulf %85, %87 : vector<8x128xf32>
    %91 = arith.addf %89, %90 : vector<8x128xf32>
    %92 = math.tanh %91 : vector<8x128xf32>
    %93 = arith.mulf %88, %92 : vector<8x128xf32>
    %94 = arith.index_cast %c3_i32 : i32 to index
    %c0_28 = arith.constant 0 : index
    %c0_29 = arith.constant 0 : index
    %95 = vector.load %arg4[%94, %c0_28, %c0_29] : memref<8x8x128xf32, #tpu.memory_space<vmem>>, vector<1x8x128xf32>
    %96 = vector.shape_cast %95 : vector<1x8x128xf32> to vector<8x128xf32>
    %97 = vector.shape_cast %93 : vector<8x128xf32> to vector<1x8x128xf32>
    tpu.vector_store %arg4[%94, %c0_28, %c0_29], %97 {strides = array<i32>} : memref<8x8x128xf32, #tpu.memory_space<vmem>>, vector<1x8x128xf32>,
    %c4_i32 = arith.constant 4 : i32
    %98 = arith.index_cast %c4_i32 : i32 to index
    %c0_30 = arith.constant 0 : index
    %c0_31 = arith.constant 0 : index
    %99 = vector.load %arg2[%98, %c0_30, %c0_31] : memref<8x8x512xf32, #tpu.memory_space<vmem>>, vector<1x8x512xf32>
    %100 = vector.shape_cast %99 : vector<1x8x512xf32> to vector<8x512xf32>
    %cst_32 = arith.constant dense<0.000000e+00> : vector<8x512xf32>
    %101 = tpu.matmul %93, %3, %cst_32 {dimension_numbers = #tpu.dot_dimension_numbers<[1], [0], [0], [1], [0, 0, 1, 1], [], []>} : vector<8x128xf32>, vector<128x512xf32>, vector<8x512xf32> -> vector<8x512xf32>
    %102 = arith.addf %100, %101 : vector<8x512xf32>
    %103 = arith.negf %102 : vector<8x512xf32>
    %104 = math.exp %103 : vector<8x512xf32>
    %cst_33 = arith.constant 1.000000e+00 : f32
    %105 = vector.broadcast %cst_33 : f32 to vector<8x512xf32>
    %106 = arith.addf %105, %104 : vector<8x512xf32>
    %107 = arith.divf %105, %106 : vector<8x512xf32>
    %108 = vector.extract_strided_slice %107 {offsets = [0, 0], sizes = [8, 128], strides = [1, 1]} : vector<8x512xf32> to vector<8x128xf32>
    %109 = vector.extract_strided_slice %107 {offsets = [0, 128], sizes = [8, 128], strides = [1, 1]} : vector<8x512xf32> to vector<8x128xf32>
    %110 = vector.extract_strided_slice %107 {offsets = [0, 256], sizes = [8, 128], strides = [1, 1]} : vector<8x512xf32> to vector<8x128xf32>
    %111 = vector.extract_strided_slice %107 {offsets = [0, 384], sizes = [8, 128], strides = [1, 1]} : vector<8x512xf32> to vector<8x128xf32>
    %112 = arith.mulf %109, %91 : vector<8x128xf32>
    %113 = arith.mulf %108, %110 : vector<8x128xf32>
    %114 = arith.addf %112, %113 : vector<8x128xf32>
    %115 = math.tanh %114 : vector<8x128xf32>
    %116 = arith.mulf %111, %115 : vector<8x128xf32>
    %117 = arith.index_cast %c4_i32 : i32 to index
    %c0_34 = arith.constant 0 : index
    %c0_35 = arith.constant 0 : index
    %118 = vector.load %arg4[%117, %c0_34, %c0_35] : memref<8x8x128xf32, #tpu.memory_space<vmem>>, vector<1x8x128xf32>
    %119 = vector.shape_cast %118 : vector<1x8x128xf32> to vector<8x128xf32>
    %120 = vector.shape_cast %116 : vector<8x128xf32> to vector<1x8x128xf32>
    tpu.vector_store %arg4[%117, %c0_34, %c0_35], %120 {strides = array<i32>} : memref<8x8x128xf32, #tpu.memory_space<vmem>>, vector<1x8x128xf32>,
    %c5_i32 = arith.constant 5 : i32
    %121 = arith.index_cast %c5_i32 : i32 to index
    %c0_36 = arith.constant 0 : index
    %c0_37 = arith.constant 0 : index
    %122 = vector.load %arg2[%121, %c0_36, %c0_37] : memref<8x8x512xf32, #tpu.memory_space<vmem>>, vector<1x8x512xf32>
    %123 = vector.shape_cast %122 : vector<1x8x512xf32> to vector<8x512xf32>
    %cst_38 = arith.constant dense<0.000000e+00> : vector<8x512xf32>
    %124 = tpu.matmul %116, %3, %cst_38 {dimension_numbers = #tpu.dot_dimension_numbers<[1], [0], [0], [1], [0, 0, 1, 1], [], []>} : vector<8x128xf32>, vector<128x512xf32>, vector<8x512xf32> -> vector<8x512xf32>
    %125 = arith.addf %123, %124 : vector<8x512xf32>
    %126 = arith.negf %125 : vector<8x512xf32>
    %127 = math.exp %126 : vector<8x512xf32>
    %cst_39 = arith.constant 1.000000e+00 : f32
    %128 = vector.broadcast %cst_39 : f32 to vector<8x512xf32>
    %129 = arith.addf %128, %127 : vector<8x512xf32>
    %130 = arith.divf %128, %129 : vector<8x512xf32>
    %131 = vector.extract_strided_slice %130 {offsets = [0, 0], sizes = [8, 128], strides = [1, 1]} : vector<8x512xf32> to vector<8x128xf32>
    %132 = vector.extract_strided_slice %130 {offsets = [0, 128], sizes = [8, 128], strides = [1, 1]} : vector<8x512xf32> to vector<8x128xf32>
    %133 = vector.extract_strided_slice %130 {offsets = [0, 256], sizes = [8, 128], strides = [1, 1]} : vector<8x512xf32> to vector<8x128xf32>
    %134 = vector.extract_strided_slice %130 {offsets = [0, 384], sizes = [8, 128], strides = [1, 1]} : vector<8x512xf32> to vector<8x128xf32>
    %135 = arith.mulf %132, %114 : vector<8x128xf32>
    %136 = arith.mulf %131, %133 : vector<8x128xf32>
    %137 = arith.addf %135, %136 : vector<8x128xf32>
    %138 = math.tanh %137 : vector<8x128xf32>
    %139 = arith.mulf %134, %138 : vector<8x128xf32>
    %140 = arith.index_cast %c5_i32 : i32 to index
    %c0_40 = arith.constant 0 : index
    %c0_41 = arith.constant 0 : index
    %141 = vector.load %arg4[%140, %c0_40, %c0_41] : memref<8x8x128xf32, #tpu.memory_space<vmem>>, vector<1x8x128xf32>
    %142 = vector.shape_cast %141 : vector<1x8x128xf32> to vector<8x128xf32>
    %143 = vector.shape_cast %139 : vector<8x128xf32> to vector<1x8x128xf32>
    tpu.vector_store %arg4[%140, %c0_40, %c0_41], %143 {strides = array<i32>} : memref<8x8x128xf32, #tpu.memory_space<vmem>>, vector<1x8x128xf32>,
    %c6_i32 = arith.constant 6 : i32
    %144 = arith.index_cast %c6_i32 : i32 to index
    %c0_42 = arith.constant 0 : index
    %c0_43 = arith.constant 0 : index
    %145 = vector.load %arg2[%144, %c0_42, %c0_43] : memref<8x8x512xf32, #tpu.memory_space<vmem>>, vector<1x8x512xf32>
    %146 = vector.shape_cast %145 : vector<1x8x512xf32> to vector<8x512xf32>
    %cst_44 = arith.constant dense<0.000000e+00> : vector<8x512xf32>
    %147 = tpu.matmul %139, %3, %cst_44 {dimension_numbers = #tpu.dot_dimension_numbers<[1], [0], [0], [1], [0, 0, 1, 1], [], []>} : vector<8x128xf32>, vector<128x512xf32>, vector<8x512xf32> -> vector<8x512xf32>
    %148 = arith.addf %146, %147 : vector<8x512xf32>
    %149 = arith.negf %148 : vector<8x512xf32>
    %150 = math.exp %149 : vector<8x512xf32>
    %cst_45 = arith.constant 1.000000e+00 : f32
    %151 = vector.broadcast %cst_45 : f32 to vector<8x512xf32>
    %152 = arith.addf %151, %150 : vector<8x512xf32>
    %153 = arith.divf %151, %152 : vector<8x512xf32>
    %154 = vector.extract_strided_slice %153 {offsets = [0, 0], sizes = [8, 128], strides = [1, 1]} : vector<8x512xf32> to vector<8x128xf32>
    %155 = vector.extract_strided_slice %153 {offsets = [0, 128], sizes = [8, 128], strides = [1, 1]} : vector<8x512xf32> to vector<8x128xf32>
    %156 = vector.extract_strided_slice %153 {offsets = [0, 256], sizes = [8, 128], strides = [1, 1]} : vector<8x512xf32> to vector<8x128xf32>
    %157 = vector.extract_strided_slice %153 {offsets = [0, 384], sizes = [8, 128], strides = [1, 1]} : vector<8x512xf32> to vector<8x128xf32>
    %158 = arith.mulf %155, %137 : vector<8x128xf32>
    %159 = arith.mulf %154, %156 : vector<8x128xf32>
    %160 = arith.addf %158, %159 : vector<8x128xf32>
    %161 = math.tanh %160 : vector<8x128xf32>
    %162 = arith.mulf %157, %161 : vector<8x128xf32>
    %163 = arith.index_cast %c6_i32 : i32 to index
    %c0_46 = arith.constant 0 : index
    %c0_47 = arith.constant 0 : index
    %164 = vector.load %arg4[%163, %c0_46, %c0_47] : memref<8x8x128xf32, #tpu.memory_space<vmem>>, vector<1x8x128xf32>
    %165 = vector.shape_cast %164 : vector<1x8x128xf32> to vector<8x128xf32>
    %166 = vector.shape_cast %162 : vector<8x128xf32> to vector<1x8x128xf32>
    tpu.vector_store %arg4[%163, %c0_46, %c0_47], %166 {strides = array<i32>} : memref<8x8x128xf32, #tpu.memory_space<vmem>>, vector<1x8x128xf32>,
    %c7_i32 = arith.constant 7 : i32
    %167 = arith.index_cast %c7_i32 : i32 to index
    %c0_48 = arith.constant 0 : index
    %c0_49 = arith.constant 0 : index
    %168 = vector.load %arg2[%167, %c0_48, %c0_49] : memref<8x8x512xf32, #tpu.memory_space<vmem>>, vector<1x8x512xf32>
    %169 = vector.shape_cast %168 : vector<1x8x512xf32> to vector<8x512xf32>
    %cst_50 = arith.constant dense<0.000000e+00> : vector<8x512xf32>
    %170 = tpu.matmul %162, %3, %cst_50 {dimension_numbers = #tpu.dot_dimension_numbers<[1], [0], [0], [1], [0, 0, 1, 1], [], []>} : vector<8x128xf32>, vector<128x512xf32>, vector<8x512xf32> -> vector<8x512xf32>
    %171 = arith.addf %169, %170 : vector<8x512xf32>
    %172 = arith.negf %171 : vector<8x512xf32>
    %173 = math.exp %172 : vector<8x512xf32>
    %cst_51 = arith.constant 1.000000e+00 : f32
    %174 = vector.broadcast %cst_51 : f32 to vector<8x512xf32>
    %175 = arith.addf %174, %173 : vector<8x512xf32>
    %176 = arith.divf %174, %175 : vector<8x512xf32>
    %177 = vector.extract_strided_slice %176 {offsets = [0, 0], sizes = [8, 128], strides = [1, 1]} : vector<8x512xf32> to vector<8x128xf32>
    %178 = vector.extract_strided_slice %176 {offsets = [0, 128], sizes = [8, 128], strides = [1, 1]} : vector<8x512xf32> to vector<8x128xf32>
    %179 = vector.extract_strided_slice %176 {offsets = [0, 256], sizes = [8, 128], strides = [1, 1]} : vector<8x512xf32> to vector<8x128xf32>
    %180 = vector.extract_strided_slice %176 {offsets = [0, 384], sizes = [8, 128], strides = [1, 1]} : vector<8x512xf32> to vector<8x128xf32>
    %181 = arith.mulf %178, %160 : vector<8x128xf32>
    %182 = arith.mulf %177, %179 : vector<8x128xf32>
    %183 = arith.addf %181, %182 : vector<8x128xf32>
    %184 = math.tanh %183 : vector<8x128xf32>
    %185 = arith.mulf %180, %184 : vector<8x128xf32>
    %186 = arith.index_cast %c7_i32 : i32 to index
    %c0_52 = arith.constant 0 : index
    %c0_53 = arith.constant 0 : index
    %187 = vector.load %arg4[%186, %c0_52, %c0_53] : memref<8x8x128xf32, #tpu.memory_space<vmem>>, vector<1x8x128xf32>
    %188 = vector.shape_cast %187 : vector<1x8x128xf32> to vector<8x128xf32>
    %189 = vector.shape_cast %185 : vector<8x128xf32> to vector<1x8x128xf32>
    tpu.vector_store %arg4[%186, %c0_52, %c0_53], %189 {strides = array<i32>} : memref<8x8x128xf32, #tpu.memory_space<vmem>>, vector<1x8x128xf32>,
    %c8_i32 = arith.constant 8 : i32
    %c0_54 = arith.constant 0 : index
    %c0_55 = arith.constant 0 : index
    %190 = vector.load %arg7[%c0_54, %c0_55] : memref<8x128xf32, #tpu.memory_space<vmem>>, vector<8x128xf32>
    tpu.vector_store %arg7[%c0_54, %c0_55], %185 {strides = array<i32>} : memref<8x128xf32, #tpu.memory_space<vmem>>, vector<8x128xf32>,
    %c0_56 = arith.constant 0 : index
    %c0_57 = arith.constant 0 : index
    %191 = vector.load %arg8[%c0_56, %c0_57] : memref<8x128xf32, #tpu.memory_space<vmem>>, vector<8x128xf32>
    tpu.vector_store %arg8[%c0_56, %c0_57], %183 {strides = array<i32>} : memref<8x128xf32, #tpu.memory_space<vmem>>, vector<8x128xf32>,
    %c0_i32_58 = arith.constant 0 : i32
    %192 = arith.cmpi eq, %arg1, %c0_i32_58 : i32
    %193 = arith.extui %192 : i1 to i32
    %c0_i32_59 = arith.constant 0 : i32
    %194 = arith.cmpi ne, %193, %c0_i32_59 : i32
    scf.if %194 {
      %c0_60 = arith.constant 0 : index
      %c0_61 = arith.constant 0 : index
      %195 = vector.load %arg5[%c0_60, %c0_61] : memref<8x128xf32, #tpu.memory_space<vmem>>, vector<8x128xf32>
      tpu.vector_store %arg5[%c0_60, %c0_61], %185 {strides = array<i32>} : memref<8x128xf32, #tpu.memory_space<vmem>>, vector<8x128xf32>,
      %c0_62 = arith.constant 0 : index
      %c0_63 = arith.constant 0 : index
      %196 = vector.load %arg6[%c0_62, %c0_63] : memref<8x128xf32, #tpu.memory_space<vmem>>, vector<8x128xf32>
      tpu.vector_store %arg6[%c0_62, %c0_63], %183 {strides = array<i32>} : memref<8x128xf32, #tpu.memory_space<vmem>>, vector<8x128xf32>,
    } else {
    }
    return
  }
  func.func @transform_0(%arg0: i32, %arg1: i32) -> (i32, i32, i32) {
    %c0_i32 = arith.constant 0 : i32
    %c0_i32_0 = arith.constant 0 : i32
    return %arg1, %arg0, %c0_i32 : i32, i32, i32
  }
  func.func @transform_1(%arg0: i32, %arg1: i32) -> (i32, i32) {
    %c0_i32 = arith.constant 0 : i32
    %c0_i32_0 = arith.constant 0 : i32
    %c0_i32_1 = arith.constant 0 : i32
    return %c0_i32, %c0_i32_0 : i32, i32
  }
  func.func @transform_2(%arg0: i32, %arg1: i32) -> (i32, i32, i32) {
    %c0_i32 = arith.constant 0 : i32
    %c0_i32_0 = arith.constant 0 : i32
    return %arg1, %arg0, %c0_i32 : i32, i32, i32
  }
  func.func @transform_3(%arg0: i32, %arg1: i32) -> (i32, i32) {
    %c0_i32 = arith.constant 0 : i32
    %c0_i32_0 = arith.constant 0 : i32
    return %arg0, %c0_i32 : i32, i32
  }
  func.func @transform_4(%arg0: i32, %arg1: i32) -> (i32, i32) {
    %c0_i32 = arith.constant 0 : i32
    %c0_i32_0 = arith.constant 0 : i32
    return %arg0, %c0_i32 : i32, i32
  }
}

</mosaic_0001>

<llo_original>
// kernel: custom_lstm.1
$region0: #{custom_lstm.1}
  #allocation0 [shape = 'u32[]', space=smem, size = 0x4, offset = 0x4, fixed_abs, tag = 'smem constant byte address 0x4 - core index']
  #allocation1 [shape = 'u32[144,128]{1,0:T(1,128)}', space=vmem, size = 0x12000, scoped, tag = 'internal scratch']
  #allocation2 [shape = 'f32[8,128]{1,0:T(8,128)}', space=vmem, size = 0x1000, scoped, tag = 'scratch operand']
  #allocation3 [shape = 'f32[8,128]{1,0:T(8,128)}', space=vmem, size = 0x1000, scoped, tag = 'scratch operand']
  %s0 = inlined_call_operand.vmem [shape: f32[8,8,512], index: 0, kind: input, shape index: {}]
  %s1 = inlined_call_operand.vmem [shape: f32[128,512], index: 1, kind: input, shape index: {}]
  %s2 = inlined_call_operand.vmem [shape: f32[8,8,128], index: 2, kind: output, shape index: {0}]
  %s3 = inlined_call_operand.vmem [shape: f32[8,128], index: 3, kind: output, shape index: {1}]
  %s4 = inlined_call_operand.vmem [shape: f32[8,128], index: 4, kind: output, shape index: {2}]
  %5 = xla_tuple %s2, %s3, %s4
  %s6 = sld [smem:[#allocation0]]
  $region42: #{custom_lstm.1} parent=0
    _
  %s8 = ssub.s32 1, %s6
  %s9 = scalar_select 0, %s8, %s6
  // Predicated region
  $region2: #{custom_lstm.1} parent=0 // pred_check
    _
  $region3: #{custom_lstm.1} parent=0 // pred_check_branch
    %11 = sbr.rel (0) target = $region5
  $region4: #{custom_lstm.1} parent=0 // pred_region
    _
  $region5: #{custom_lstm.1} parent=0 // pred_fallthru
    _
  // Predicated region
  $region6: #{custom_lstm.1} parent=0 // pred_check
    _
  $region7: #{custom_lstm.1} parent=0 // pred_check_branch
    %13 = sbr.rel (0) target = $region9
  $region8: #{custom_lstm.1} parent=0 // pred_region
    _
  $region9: #{custom_lstm.1} parent=0 // pred_fallthru
    _
  %p14 = scmp.eq.s32.totalorder 0, 0
  // Predicated region
  $region10: #{custom_lstm.1} parent=0 // pred_check
    %p15 = pneg %p14
  $region11: #{custom_lstm.1} parent=0 // pred_check_branch
    %17 = sbr.rel (%p15) target = $region13
  $region12: #{custom_lstm.1} parent=0 // pred_region
    %18 = vst [vmem:[#allocation2] sm:$0xff] 0.0
    %19 = vst [vmem:[#allocation3] sm:$0xff] 0.0
  $region13: #{custom_lstm.1} parent=0 // pred_fallthru
    _
  %v20 = vld [vmem:[%s1] sm:$0xff]
  %v21 = vld [vmem:[%s1 + $0x8] sm:$0xff]
  %v22 = vld [vmem:[%s1 + $0x10] sm:$0xff]
  %v23 = vld [vmem:[%s1 + $0x18] sm:$0xff]
  %v24 = vld [vmem:[%s1 + $0x20] sm:$0xff]
  %v25 = vld [vmem:[%s1 + $0x28] sm:$0xff]
  %v26 = vld [vmem:[%s1 + $0x30] sm:$0xff]
  %v27 = vld [vmem:[%s1 + $0x38] sm:$0xff]
  %v28 = vld [vmem:[%s1 + $0x40] sm:$0xff]
  %v29 = vld [vmem:[%s1 + $0x48] sm:$0xff]
  %v30 = vld [vmem:[%s1 + $0x50] sm:$0xff]
  %v31 = vld [vmem:[%s1 + $0x58] sm:$0xff]
  %v32 = vld [vmem:[%s1 + $0x60] sm:$0xff]
  %v33 = vld [vmem:[%s1 + $0x68] sm:$0xff]
  %v34 = vld [vmem:[%s1 + $0x70] sm:$0xff]
  %v35 = vld [vmem:[%s1 + $0x78] sm:$0xff]
  %v36 = vld [vmem:[%s1 + $0x80] sm:$0xff]
  %v37 = vld [vmem:[%s1 + $0x88] sm:$0xff]
  %v38 = vld [vmem:[%s1 + $0x90] sm:$0xff]
  %v39 = vld [vmem:[%s1 + $0x98] sm:$0xff]
  %v40 = vld [vmem:[%s1 + $0xa0] sm:$0xff]
  %v41 = vld [vmem:[%s1 + $0xa8] sm:$0xff]
  %v42 = vld [vmem:[%s1 + $0xb0] sm:$0xff]
  %v43 = vld [vmem:[%s1 + $0xb8] sm:$0xff]
  %v44 = vld [vmem:[%s1 + $0xc0] sm:$0xff]
  %v45 = vld [vmem:[%s1 + $0xc8] sm:$0xff]
  %v46 = vld [vmem:[%s1 + $0xd0] sm:$0xff]
  %v47 = vld [vmem:[%s1 + $0xd8] sm:$0xff]
  %v48 = vld [vmem:[%s1 + $0xe0] sm:$0xff]
  %v49 = vld [vmem:[%s1 + $0xe8] sm:$0xff]
  %v50 = vld [vmem:[%s1 + $0xf0] sm:$0xff]
  %v51 = vld [vmem:[%s1 + $0xf8] sm:$0xff]
  %v52 = vld [vmem:[%s1 + $0x100] sm:$0xff]
  %v53 = vld [vmem:[%s1 + $0x108] sm:$0xff]
  %v54 = vld [vmem:[%s1 + $0x110] sm:$0xff]
  %v55 = vld [vmem:[%s1 + $0x118] sm:$0xff]
  %v56 = vld [vmem:[%s1 + $0x120] sm:$0xff]
  %v57 = vld [vmem:[%s1 + $0x128] sm:$0xff]
  %v58 = vld [vmem:[%s1 + $0x130] sm:$0xff]
  %v59 = vld [vmem:[%s1 + $0x138] sm:$0xff]
  %v60 = vld [vmem:[%s1 + $0x140] sm:$0xff]
  %v61 = vld [vmem:[%s1 + $0x148] sm:$0xff]
  %v62 = vld [vmem:[%s1 + $0x150] sm:$0xff]
  %v63 = vld [vmem:[%s1 + $0x158] sm:$0xff]
  %v64 = vld [vmem:[%s1 + $0x160] sm:$0xff]
  %v65 = vld [vmem:[%s1 + $0x168] sm:$0xff]
  %v66 = vld [vmem:[%s1 + $0x170] sm:$0xff]
  %v67 = vld [vmem:[%s1 + $0x178] sm:$0xff]
  %v68 = vld [vmem:[%s1 + $0x180] sm:$0xff]
  %v69 = vld [vmem:[%s1 + $0x188] sm:$0xff]
  %v70 = vld [vmem:[%s1 + $0x190] sm:$0xff]
  %v71 = vld [vmem:[%s1 + $0x198] sm:$0xff]
  %v72 = vld [vmem:[%s1 + $0x1a0] sm:$0xff]
  %v73 = vld [vmem:[%s1 + $0x1a8] sm:$0xff]
  %v74 = vld [vmem:[%s1 + $0x1b0] sm:$0xff]
  %v75 = vld [vmem:[%s1 + $0x1b8] sm:$0xff]
  %v76 = vld [vmem:[%s1 + $0x1c0] sm:$0xff]
  %v77 = vld [vmem:[%s1 + $0x1c8] sm:$0xff]
  %v78 = vld [vmem:[%s1 + $0x1d0] sm:$0xff]
  %v79 = vld [vmem:[%s1 + $0x1d8] sm:$0xff]
  %v80 = vld [vmem:[%s1 + $0x1e0] sm:$0xff]
  %v81 = vld [vmem:[%s1 + $0x1e8] sm:$0xff]
  %v82 = vld [vmem:[%s1 + $0x1f0] sm:$0xff]
  %v83 = vld [vmem:[%s1 + $0x1f8] sm:$0xff]
  %v84 = vld [vmem:[#allocation2] sm:$0xff]
  %v85 = vld [vmem:[#allocation3] sm:$0xff]
  %v86 = vld [vmem:[%s0] sm:$0xff]
  %v87 = vld [vmem:[%s0 + $0x8] sm:$0xff]
  %v88 = vld [vmem:[%s0 + $0x10] sm:$0xff]
  %v89 = vld [vmem:[%s0 + $0x18] sm:$0xff]
  %90 = vmatprep.subr.mxu0 %v21
  %91 = vmatpush1.msra.mxu0 %v20
  %92 = vmatprep.subr.mxu0 %v25
  %93 = vmatpush1.msra.mxu0 %v24
  %94 = vmatprep.subr.mxu0 %v29
  %95 = vmatpush1.msra.mxu0 %v28
  %96 = vmatprep.subr.mxu0 %v33
  %97 = vmatpush1.msra.mxu0 %v32
  %98 = vmatprep.subr.mxu0 %v37
  %99 = vmatpush1.msra.mxu0 %v36
  %100 = vmatprep.subr.mxu0 %v41
  %101 = vmatpush1.msra.mxu0 %v40
  %102 = vmatprep.subr.mxu0 %v45
  %103 = vmatpush1.msra.mxu0 %v44
  %104 = vmatprep.subr.mxu0 %v49
  %105 = vmatpush1.msra.mxu0 %v48
  %106 = vmatprep.subr.mxu0 %v53
  %107 = vmatpush1.msra.mxu0 %v52
  %108 = vmatprep.subr.mxu0 %v57
  %109 = vmatpush1.msra.mxu0 %v56
  %110 = vmatprep.subr.mxu0 %v61
  %111 = vmatpush1.msra.mxu0 %v60
  %112 = vmatprep.subr.mxu0 %v65
  %113 = vmatpush1.msra.mxu0 %v64
  %114 = vmatprep.subr.mxu0 %v69
  %115 = vmatpush1.msra.mxu0 %v68
  %116 = vmatprep.subr.mxu0 %v73
  %117 = vmatpush1.msra.mxu0 %v72
  %118 = vmatprep.subr.mxu0 %v77
  %119 = vmatpush1.msra.mxu0 %v76
  %120 = vmatprep.subr.mxu0 %v81
  %121 = vmatpush1.msra.mxu0 %v80
  %122 = vmatprep.subr.mxu0 0.0
  %123 = vmatpush1.msra.mxu0 0.0
  %124 = vmatprep.subr.mxu0 0.0
  %125 = vmatpush1.msra.mxu0 0.0
  %126 = vmatprep.subr.mxu0 0.0
  %127 = vmatpush1.msra.mxu0 0.0
  %128 = vmatprep.subr.mxu0 0.0
  %129 = vmatpush1.msra.mxu0 0.0
  %130 = vmatprep.subr.mxu0 0.0
  %131 = vmatpush1.msra.mxu0 0.0
  %132 = vmatprep.subr.mxu0 0.0
  %133 = vmatpush1.msra.mxu0 0.0
  %134 = vmatprep.subr.mxu0 0.0
  %135 = vmatpush1.msra.mxu0 0.0
  %136 = vmatprep.subr.mxu0 0.0
  %137 = vmatpush1.msra.mxu0 0.0
  %138 = vmatprep.subr.mxu0 0.0
  %139 = vmatpush1.msra.mxu0 0.0
  %140 = vmatprep.subr.mxu0 0.0
  %141 = vmatpush1.msra.mxu0 0.0
  %142 = vmatprep.subr.mxu0 0.0
  %143 = vmatpush1.msra.mxu0 0.0
  %144 = vmatprep.subr.mxu0 0.0
  %145 = vmatpush1.msra.mxu0 0.0
  %146 = vmatprep.subr.mxu0 0.0
  %147 = vmatpush1.msra.mxu0 0.0
  %148 = vmatprep.subr.mxu0 0.0
  %149 = vmatpush1.msra.mxu0 0.0
  %150 = vmatprep.subr.mxu0 0.0
  %151 = vmatpush1.msra.mxu0 0.0
  %152 = vmatprep.subr.mxu0 0.0
  %153 = vmatpush1.msra.mxu0 0.0
  %154 = vmatprep.mubr.f32.mxu0 0.0
  %155 = vmatmul.mubr.f32.gmra.mrb[0].mxu0 %v84
  %v156 = vpop.f32.mrb[0].mxu0
  %v157 = vadd.f32 0.0, %v156
  %v158 = vpop.f32.mrb[0].mxu0
  %v159 = vadd.f32 0.0, %v158
  %160 = vdwg.mxu0
  %161 = vmatprep.subr.mxu0 %v23
  %162 = vmatpush1.msra.mxu0 %v22
  %163 = vmatprep.subr.mxu0 %v27
  %164 = vmatpush1.msra.mxu0 %v26
  %165 = vmatprep.subr.mxu0 %v31
  %166 = vmatpush1.msra.mxu0 %v30
  %167 = vmatprep.subr.mxu0 %v35
  %168 = vmatpush1.msra.mxu0 %v34
  %169 = vmatprep.subr.mxu0 %v39
  %170 = vmatpush1.msra.mxu0 %v38
  %171 = vmatprep.subr.mxu0 %v43
  %172 = vmatpush1.msra.mxu0 %v42
  %173 = vmatprep.subr.mxu0 %v47
  %174 = vmatpush1.msra.mxu0 %v46
  %175 = vmatprep.subr.mxu0 %v51
  %176 = vmatpush1.msra.mxu0 %v50
  %177 = vmatprep.subr.mxu0 %v55
  %178 = vmatpush1.msra.mxu0 %v54
  %179 = vmatprep.subr.mxu0 %v59
  %180 = vmatpush1.msra.mxu0 %v58
  %181 = vmatprep.subr.mxu0 %v63
  %182 = vmatpush1.msra.mxu0 %v62
  %183 = vmatprep.subr.mxu0 %v67
  %184 = vmatpush1.msra.mxu0 %v66
  %185 = vmatprep.subr.mxu0 %v71
  %186 = vmatpush1.msra.mxu0 %v70
  %187 = vmatprep.subr.mxu0 %v75
  %188 = vmatpush1.msra.mxu0 %v74
  %189 = vmatprep.subr.mxu0 %v79
  %190 = vmatpush1.msra.mxu0 %v78
  %191 = vmatprep.subr.mxu0 %v83
  %192 = vmatpush1.msra.mxu0 %v82
  %193 = vmatprep.subr.mxu0 0.0
  %194 = vmatpush1.msra.mxu0 0.0
  %195 = vmatprep.subr.mxu0 0.0
  %196 = vmatpush1.msra.mxu0 0.0
  %197 = vmatprep.subr.mxu0 0.0
  %198 = vmatpush1.msra.mxu0 0.0
  %199 = vmatprep.subr.mxu0 0.0
  %200 = vmatpush1.msra.mxu0 0.0
  %201 = vmatprep.subr.mxu0 0.0
  %202 = vmatpush1.msra.mxu0 0.0
  %203 = vmatprep.subr.mxu0 0.0
  %204 = vmatpush1.msra.mxu0 0.0
  %205 = vmatprep.subr.mxu0 0.0
  %206 = vmatpush1.msra.mxu0 0.0
  %207 = vmatprep.subr.mxu0 0.0
  %208 = vmatpush1.msra.mxu0 0.0
  %209 = vmatprep.subr.mxu0 0.0
  %210 = vmatpush1.msra.mxu0 0.0
  %211 = vmatprep.subr.mxu0 0.0
  %212 = vmatpush1.msra.mxu0 0.0
  %213 = vmatprep.subr.mxu0 0.0
  %214 = vmatpush1.msra.mxu0 0.0
  %215 = vmatprep.subr.mxu0 0.0
  %216 = vmatpush1.msra.mxu0 0.0
  %217 = vmatprep.subr.mxu0 0.0
  %218 = vmatpush1.msra.mxu0 0.0
  %219 = vmatprep.subr.mxu0 0.0
  %220 = vmatpush1.msra.mxu0 0.0
  %221 = vmatprep.subr.mxu0 0.0
  %222 = vmatpush1.msra.mxu0 0.0
  %223 = vmatprep.subr.mxu0 0.0
  %224 = vmatpush1.msra.mxu0 0.0
  %225 = vmatprep.mubr.f32.mxu0 0.0
  %226 = vmatmul.mubr.f32.gmra.mrb[0].mxu0 %v84
  %v227 = vpop.f32.mrb[0].mxu0
  %v228 = vadd.f32 0.0, %v227
  %v229 = vpop.f32.mrb[0].mxu0
  %v230 = vadd.f32 0.0, %v229
  %231 = vdwg.mxu0
  %v232 = vadd.f32 %v86, %v157
  %v233 = vadd.f32 %v87, %v159
  %v234 = vadd.f32 %v88, %v228
  %v235 = vadd.f32 %v89, %v230
  %v236 = vxor.u32 %v232, 2147483648
  %v237 = vxor.u32 %v233, 2147483648
  %v238 = vxor.u32 %v234, 2147483648
  %v239 = vxor.u32 %v235, 2147483648
  %v240 = vmul.f32 %v236, 1.442695
  %v241 = vpow.pop %v240
  %v242 = vmul.f32 %v237, 1.442695
  %v243 = vpow.pop %v242
  %v244 = vmul.f32 %v238, 1.442695
  %v245 = vpow.pop %v244
  %v246 = vmul.f32 %v239, 1.442695
  %v247 = vpow.pop %v246
  %v248 = vadd.f32 %v241, 1.0
  %v249 = vadd.f32 %v243, 1.0
  %v250 = vadd.f32 %v245, 1.0
  %v251 = vadd.f32 %v247, 1.0
  %v252 = vrcp.pop %v248
  %v253 = vmul.f32 1.0, %v252
  %v254 = vrcp.pop %v249
  %v255 = vmul.f32 1.0, %v254
  %v256 = vrcp.pop %v250
  %v257 = vmul.f32 1.0, %v256
  %v258 = vrcp.pop %v251
  %v259 = vmul.f32 1.0, %v258
  %v260 = vmul.f32 %v255, %v85
  %v261 = vmul.f32 %v253, %v257
  %v262 = vadd.f32 %v260, %v261
  %v263 = vtanh.pop %v262
  %v264 = vmul.f32 %v259, %v263
  %265 = vst [vmem:[%s2] sm:$0xff] %v264
  %s266 = scalar_lea.vmem %s0, 32
  %v267 = vld [vmem:[%s266] sm:$0xff]
  %v268 = vld [vmem:[%s266 + $0x8] sm:$0xff]
  %v269 = vld [vmem:[%s266 + $0x10] sm:$0xff]
  %v270 = vld [vmem:[%s266 + $0x18] sm:$0xff]
  %271 = vmatprep.subr.mxu0 %v21
  %272 = vmatpush1.msra.mxu0 %v20
  %273 = vmatprep.subr.mxu0 %v25
  %274 = vmatpush1.msra.mxu0 %v24
  %275 = vmatprep.subr.mxu0 %v29
  %276 = vmatpush1.msra.mxu0 %v28
  %277 = vmatprep.subr.mxu0 %v33
  %278 = vmatpush1.msra.mxu0 %v32
  %279 = vmatprep.subr.mxu0 %v37
  %280 = vmatpush1.msra.mxu0 %v36
  %281 = vmatprep.subr.mxu0 %v41
  %282 = vmatpush1.msra.mxu0 %v40
  %283 = vmatprep.subr.mxu0 %v45
  %284 = vmatpush1.msra.mxu0 %v44
  %285 = vmatprep.subr.mxu0 %v49
  %286 = vmatpush1.msra.mxu0 %v48
  %287 = vmatprep.subr.mxu0 %v53
  %288 = vmatpush1.msra.mxu0 %v52
  %289 = vmatprep.subr.mxu0 %v57
  %290 = vmatpush1.msra.mxu0 %v56
  %291 = vmatprep.subr.mxu0 %v61
  %292 = vmatpush1.msra.mxu0 %v60
  %293 = vmatprep.subr.mxu0 %v65
  %294 = vmatpush1.msra.mxu0 %v64
  %295 = vmatprep.subr.mxu0 %v69
  %296 = vmatpush1.msra.mxu0 %v68
  %297 = vmatprep.subr.mxu0 %v73
  %298 = vmatpush1.msra.mxu0 %v72
  %299 = vmatprep.subr.mxu0 %v77
  %300 = vmatpush1.msra.mxu0 %v76
  %301 = vmatprep.subr.mxu0 %v81
  %302 = vmatpush1.msra.mxu0 %v80
  %303 = vmatprep.subr.mxu0 0.0
  %304 = vmatpush1.msra.mxu0 0.0
  %305 = vmatprep.subr.mxu0 0.0
  %306 = vmatpush1.msra.mxu0 0.0
  %307 = vmatprep.subr.mxu0 0.0
  %308 = vmatpush1.msra.mxu0 0.0
  %309 = vmatprep.subr.mxu0 0.0
  %310 = vmatpush1.msra.mxu0 0.0
  %311 = vmatprep.subr.mxu0 0.0
  %312 = vmatpush1.msra.mxu0 0.0
  %313 = vmatprep.subr.mxu0 0.0
  %314 = vmatpush1.msra.mxu0 0.0
  %315 = vmatprep.subr.mxu0 0.0
  %316 = vmatpush1.msra.mxu0 0.0
  %317 = vmatprep.subr.mxu0 0.0
  %318 = vmatpush1.msra.mxu0 0.0
  %319 = vmatprep.subr.mxu0 0.0
  %320 = vmatpush1.msra.mxu0 0.0
  %321 = vmatprep.subr.mxu0 0.0
  %322 = vmatpush1.msra.mxu0 0.0
  %323 = vmatprep.subr.mxu0 0.0
  %324 = vmatpush1.msra.mxu0 0.0
  %325 = vmatprep.subr.mxu0 0.0
  %326 = vmatpush1.msra.mxu0 0.0
  %327 = vmatprep.subr.mxu0 0.0
  %328 = vmatpush1.msra.mxu0 0.0
  %329 = vmatprep.subr.mxu0 0.0
  %330 = vmatpush1.msra.mxu0 0.0
  %331 = vmatprep.subr.mxu0 0.0
  %332 = vmatpush1.msra.mxu0 0.0
  %333 = vmatprep.subr.mxu0 0.0
  %334 = vmatpush1.msra.mxu0 0.0
  %335 = vmatprep.mubr.f32.mxu0 0.0
  %336 = vmatmul.mubr.f32.gmra.mrb[0].mxu0 %v264
  %v337 = vpop.f32.mrb[0].mxu0
  %v338 = vadd.f32 0.0, %v337
  %v339 = vpop.f32.mrb[0].mxu0
  %v340 = vadd.f32 0.0, %v339
  %341 = vdwg.mxu0
  %342 = vmatprep.subr.mxu0 %v23
  %343 = vmatpush1.msra.mxu0 %v22
  %344 = vmatprep.subr.mxu0 %v27
  %345 = vmatpush1.msra.mxu0 %v26
  %346 = vmatprep.subr.mxu0 %v31
  %347 = vmatpush1.msra.mxu0 %v30
  %348 = vmatprep.subr.mxu0 %v35
  %349 = vmatpush1.msra.mxu0 %v34
  %350 = vmatprep.subr.mxu0 %v39
  %351 = vmatpush1.msra.mxu0 %v38
  %352 = vmatprep.subr.mxu0 %v43
  %353 = vmatpush1.msra.mxu0 %v42
  %354 = vmatprep.subr.mxu0 %v47
  %355 = vmatpush1.msra.mxu0 %v46
  %356 = vmatprep.subr.mxu0 %v51
  %357 = vmatpush1.msra.mxu0 %v50
  %358 = vmatprep.subr.mxu0 %v55
  %359 = vmatpush1.msra.mxu0 %v54
  %360 = vmatprep.subr.mxu0 %v59
  %361 = vmatpush1.msra.mxu0 %v58
  %362 = vmatprep.subr.mxu0 %v63
  %363 = vmatpush1.msra.mxu0 %v62
  %364 = vmatprep.subr.mxu0 %v67
  %365 = vmatpush1.msra.mxu0 %v66
  %366 = vmatprep.subr.mxu0 %v71
  %367 = vmatpush1.msra.mxu0 %v70
  %368 = vmatprep.subr.mxu0 %v75
  %369 = vmatpush1.msra.mxu0 %v74
  %370 = vmatprep.subr.mxu0 %v79
  %371 = vmatpush1.msra.mxu0 %v78
  %372 = vmatprep.subr.mxu0 %v83
  %373 = vmatpush1.msra.mxu0 %v82
  %374 = vmatprep.subr.mxu0 0.0
  %375 = vmatpush1.msra.mxu0 0.0
  %376 = vmatprep.subr.mxu0 0.0
  %377 = vmatpush1.msra.mxu0 0.0
  %378 = vmatprep.subr.mxu0 0.0
  %379 = vmatpush1.msra.mxu0 0.0
  %380 = vmatprep.subr.mxu0 0.0
  %381 = vmatpush1.msra.mxu0 0.0
  %382 = vmatprep.subr.mxu0 0.0
  %383 = vmatpush1.msra.mxu0 0.0
  %384 = vmatprep.subr.mxu0 0.0
  %385 = vmatpush1.msra.mxu0 0.0
  %386 = vmatprep.subr.mxu0 0.0
  %387 = vmatpush1.msra.mxu0 0.0
  %388 = vmatprep.subr.mxu0 0.0
  %389 = vmatpush1.msra.mxu0 0.0
  %390 = vmatprep.subr.mxu0 0.0
  %391 = vmatpush1.msra.mxu0 0.0
  %392 = vmatprep.subr.mxu0 0.0
  %393 = vmatpush1.msra.mxu0 0.0
  %394 = vmatprep.subr.mxu0 0.0
  %395 = vmatpush1.msra.mxu0 0.0
  %396 = vmatprep.subr.mxu0 0.0
  %397 = vmatpush1.msra.mxu0 0.0
  %398 = vmatprep.subr.mxu0 0.0
  %399 = vmatpush1.msra.mxu0 0.0
  %400 = vmatprep.subr.mxu0 0.0
  %401 = vmatpush1.msra.mxu0 0.0
  %402 = vmatprep.subr.mxu0 0.0
  %403 = vmatpush1.msra.mxu0 0.0
  %404 = vmatprep.subr.mxu0 0.0
  %405 = vmatpush1.msra.mxu0 0.0
  %406 = vmatprep.mubr.f32.mxu0 0.0
  %407 = vmatmul.mubr.f32.gmra.mrb[0].mxu0 %v264
  %v408 = vpop.f32.mrb[0].mxu0
  %v409 = vadd.f32 0.0, %v408
  %v410 = vpop.f32.mrb[0].mxu0
  %v411 = vadd.f32 0.0, %v410
  %412 = vdwg.mxu0
  %v413 = vadd.f32 %v267, %v338
  %v414 = vadd.f32 %v268, %v340
  %v415 = vadd.f32 %v269, %v409
  %v416 = vadd.f32 %v270, %v411
  %v417 = vxor.u32 %v413, 2147483648
  %v418 = vxor.u32 %v414, 2147483648
  %v419 = vxor.u32 %v415, 2147483648
  %v420 = vxor.u32 %v416, 2147483648
  %v421 = vmul.f32 %v417, 1.442695
  %v422 = vpow.pop %v421
  %v423 = vmul.f32 %v418, 1.442695
  %v424 = vpow.pop %v423
  %v425 = vmul.f32 %v419, 1.442695
  %v426 = vpow.pop %v425
  %v427 = vmul.f32 %v420, 1.442695
  %v428 = vpow.pop %v427
  %v429 = vadd.f32 %v422, 1.0
  %v430 = vadd.f32 %v424, 1.0
  %v431 = vadd.f32 %v426, 1.0
  %v432 = vadd.f32 %v428, 1.0
  %v433 = vrcp.pop %v429
  %v434 = vmul.f32 1.0, %v433
  %v435 = vrcp.pop %v430
  %v436 = vmul.f32 1.0, %v435
  %v437 = vrcp.pop %v431
  %v438 = vmul.f32 1.0, %v437
  %v439 = vrcp.pop %v432
  %v440 = vmul.f32 1.0, %v439
  %v441 = vmul.f32 %v436, %v262
  %v442 = vmul.f32 %v434, %v438
  %v443 = vadd.f32 %v441, %v442
  %v444 = vtanh.pop %v443
  %v445 = vmul.f32 %v440, %v444
  %s446 = scalar_lea.vmem %s2, 8
  %447 = vst [vmem:[%s446] sm:$0xff] %v445
  %s448 = scalar_lea.vmem %s0, 64
  %v449 = vld [vmem:[%s448] sm:$0xff]
  %v450 = vld [vmem:[%s448 + $0x8] sm:$0xff]
  %v451 = vld [vmem:[%s448 + $0x10] sm:$0xff]
  %v452 = vld [vmem:[%s448 + $0x18] sm:$0xff]
  %453 = vmatprep.subr.mxu0 %v21
  %454 = vmatpush1.msra.mxu0 %v20
  %455 = vmatprep.subr.mxu0 %v25
  %456 = vmatpush1.msra.mxu0 %v24
  %457 = vmatprep.subr.mxu0 %v29
  %458 = vmatpush1.msra.mxu0 %v28
  %459 = vmatprep.subr.mxu0 %v33
  %460 = vmatpush1.msra.mxu0 %v32
  %461 = vmatprep.subr.mxu0 %v37
  %462 = vmatpush1.msra.mxu0 %v36
  %463 = vmatprep.subr.mxu0 %v41
  %464 = vmatpush1.msra.mxu0 %v40
  %465 = vmatprep.subr.mxu0 %v45
  %466 = vmatpush1.msra.mxu0 %v44
  %467 = vmatprep.subr.mxu0 %v49
  %468 = vmatpush1.msra.mxu0 %v48
  %469 = vmatprep.subr.mxu0 %v53
  %470 = vmatpush1.msra.mxu0 %v52
  %471 = vmatprep.subr.mxu0 %v57
  %472 = vmatpush1.msra.mxu0 %v56
  %473 = vmatprep.subr.mxu0 %v61
  %474 = vmatpush1.msra.mxu0 %v60
  %475 = vmatprep.subr.mxu0 %v65
  %476 = vmatpush1.msra.mxu0 %v64
  %477 = vmatprep.subr.mxu0 %v69
  %478 = vmatpush1.msra.mxu0 %v68
  %479 = vmatprep.subr.mxu0 %v73
  %480 = vmatpush1.msra.mxu0 %v72
  %481 = vmatprep.subr.mxu0 %v77
  %482 = vmatpush1.msra.mxu0 %v76
  %483 = vmatprep.subr.mxu0 %v81
  %484 = vmatpush1.msra.mxu0 %v80
  %485 = vmatprep.subr.mxu0 0.0
  %486 = vmatpush1.msra.mxu0 0.0
  %487 = vmatprep.subr.mxu0 0.0
  %488 = vmatpush1.msra.mxu0 0.0
  %489 = vmatprep.subr.mxu0 0.0
  %490 = vmatpush1.msra.mxu0 0.0
  %491 = vmatprep.subr.mxu0 0.0
  %492 = vmatpush1.msra.mxu0 0.0
  %493 = vmatprep.subr.mxu0 0.0
  %494 = vmatpush1.msra.mxu0 0.0
  %495 = vmatprep.subr.mxu0 0.0
  %496 = vmatpush1.msra.mxu0 0.0
  %497 = vmatprep.subr.mxu0 0.0
  %498 = vmatpush1.msra.mxu0 0.0
  %499 = vmatprep.subr.mxu0 0.0
  %500 = vmatpush1.msra.mxu0 0.0
  %501 = vmatprep.subr.mxu0 0.0
  %502 = vmatpush1.msra.mxu0 0.0
  %503 = vmatprep.subr.mxu0 0.0
  %504 = vmatpush1.msra.mxu0 0.0
  %505 = vmatprep.subr.mxu0 0.0
  %506 = vmatpush1.msra.mxu0 0.0
  %507 = vmatprep.subr.mxu0 0.0
  %508 = vmatpush1.msra.mxu0 0.0
  %509 = vmatprep.subr.mxu0 0.0
  %510 = vmatpush1.msra.mxu0 0.0
  %511 = vmatprep.subr.mxu0 0.0
  %512 = vmatpush1.msra.mxu0 0.0
  %513 = vmatprep.subr.mxu0 0.0
  %514 = vmatpush1.msra.mxu0 0.0
  %515 = vmatprep.subr.mxu0 0.0
  %516 = vmatpush1.msra.mxu0 0.0
  %517 = vmatprep.mubr.f32.mxu0 0.0
  %518 = vmatmul.mubr.f32.gmra.mrb[0].mxu0 %v445
  %v519 = vpop.f32.mrb[0].mxu0
  %v520 = vadd.f32 0.0, %v519
  %v521 = vpop.f32.mrb[0].mxu0
  %v522 = vadd.f32 0.0, %v521
  %523 = vdwg.mxu0
  %524 = vmatprep.subr.mxu0 %v23
  %525 = vmatpush1.msra.mxu0 %v22
  %526 = vmatprep.subr.mxu0 %v27
  %527 = vmatpush1.msra.mxu0 %v26
  %528 = vmatprep.subr.mxu0 %v31
  %529 = vmatpush1.msra.mxu0 %v30
  %530 = vmatprep.subr.mxu0 %v35
  %531 = vmatpush1.msra.mxu0 %v34
  %532 = vmatprep.subr.mxu0 %v39
  %533 = vmatpush1.msra.mxu0 %v38
  %534 = vmatprep.subr.mxu0 %v43
  %535 = vmatpush1.msra.mxu0 %v42
  %536 = vmatprep.subr.mxu0 %v47
  %537 = vmatpush1.msra.mxu0 %v46
  %538 = vmatprep.subr.mxu0 %v51
  %539 = vmatpush1.msra.mxu0 %v50
  %540 = vmatprep.subr.mxu0 %v55
  %541 = vmatpush1.msra.mxu0 %v54
  %542 = vmatprep.subr.mxu0 %v59
  %543 = vmatpush1.msra.mxu0 %v58
  %544 = vmatprep.subr.mxu0 %v63
  %545 = vmatpush1.msra.mxu0 %v62
  %546 = vmatprep.subr.mxu0 %v67
  %547 = vmatpush1.msra.mxu0 %v66
  %548 = vmatprep.subr.mxu0 %v71
  %549 = vmatpush1.msra.mxu0 %v70
  %550 = vmatprep.subr.mxu0 %v75
  %551 = vmatpush1.msra.mxu0 %v74
  %552 = vmatprep.subr.mxu0 %v79
  %553 = vmatpush1.msra.mxu0 %v78
  %554 = vmatprep.subr.mxu0 %v83
  %555 = vmatpush1.msra.mxu0 %v82
  %556 = vmatprep.subr.mxu0 0.0
  %557 = vmatpush1.msra.mxu0 0.0
  %558 = vmatprep.subr.mxu0 0.0
  %559 = vmatpush1.msra.mxu0 0.0
  %560 = vmatprep.subr.mxu0 0.0
  %561 = vmatpush1.msra.mxu0 0.0
  %562 = vmatprep.subr.mxu0 0.0
  %563 = vmatpush1.msra.mxu0 0.0
  %564 = vmatprep.subr.mxu0 0.0
  %565 = vmatpush1.msra.mxu0 0.0
  %566 = vmatprep.subr.mxu0 0.0
  %567 = vmatpush1.msra.mxu0 0.0
  %568 = vmatprep.subr.mxu0 0.0
  %569 = vmatpush1.msra.mxu0 0.0
  %570 = vmatprep.subr.mxu0 0.0
  %571 = vmatpush1.msra.mxu0 0.0
  %572 = vmatprep.subr.mxu0 0.0
  %573 = vmatpush1.msra.mxu0 0.0
  %574 = vmatprep.subr.mxu0 0.0
  %575 = vmatpush1.msra.mxu0 0.0
  %576 = vmatprep.subr.mxu0 0.0
  %577 = vmatpush1.msra.mxu0 0.0
  %578 = vmatprep.subr.mxu0 0.0
  %579 = vmatpush1.msra.mxu0 0.0
  %580 = vmatprep.subr.mxu0 0.0
  %581 = vmatpush1.msra.mxu0 0.0
  %582 = vmatprep.subr.mxu0 0.0
  %583 = vmatpush1.msra.mxu0 0.0
  %584 = vmatprep.subr.mxu0 0.0
  %585 = vmatpush1.msra.mxu0 0.0
  %586 = vmatprep.subr.mxu0 0.0
  %587 = vmatpush1.msra.mxu0 0.0
  %588 = vmatprep.mubr.f32.mxu0 0.0
  %589 = vmatmul.mubr.f32.gmra.mrb[0].mxu0 %v445
  %v590 = vpop.f32.mrb[0].mxu0
  %v591 = vadd.f32 0.0, %v590
  %v592 = vpop.f32.mrb[0].mxu0
  %v593 = vadd.f32 0.0, %v592
  %594 = vdwg.mxu0
  %v595 = vadd.f32 %v449, %v520
  %v596 = vadd.f32 %v450, %v522
  %v597 = vadd.f32 %v451, %v591
  %v598 = vadd.f32 %v452, %v593
  %v599 = vxor.u32 %v595, 2147483648
  %v600 = vxor.u32 %v596, 2147483648
  %v601 = vxor.u32 %v597, 2147483648
  %v602 = vxor.u32 %v598, 2147483648
  %v603 = vmul.f32 %v599, 1.442695
  %v604 = vpow.pop %v603
  %v605 = vmul.f32 %v600, 1.442695
  %v606 = vpow.pop %v605
  %v607 = vmul.f32 %v601, 1.442695
  %v608 = vpow.pop %v607
  %v609 = vmul.f32 %v602, 1.442695
  %v610 = vpow.pop %v609
  %v611 = vadd.f32 %v604, 1.0
  %v612 = vadd.f32 %v606, 1.0
  %v613 = vadd.f32 %v608, 1.0
  %v614 = vadd.f32 %v610, 1.0
  %v615 = vrcp.pop %v611
  %v616 = vmul.f32 1.0, %v615
  %v617 = vrcp.pop %v612
  %v618 = vmul.f32 1.0, %v617
  %v619 = vrcp.pop %v613
  %v620 = vmul.f32 1.0, %v619
  %v621 = vrcp.pop %v614
  %v622 = vmul.f32 1.0, %v621
  %v623 = vmul.f32 %v618, %v443
  %v624 = vmul.f32 %v616, %v620
  %v625 = vadd.f32 %v623, %v624
  %v626 = vtanh.pop %v625
  %v627 = vmul.f32 %v622, %v626
  %s628 = scalar_lea.vmem %s2, 16
  %629 = vst [vmem:[%s628] sm:$0xff] %v627
  %s630 = scalar_lea.vmem %s0, 96
  %v631 = vld [vmem:[%s630] sm:$0xff]
  %v632 = vld [vmem:[%s630 + $0x8] sm:$0xff]
  %v633 = vld [vmem:[%s630 + $0x10] sm:$0xff]
  %v634 = vld [vmem:[%s630 + $0x18] sm:$0xff]
  %635 = vmatprep.subr.mxu0 %v21
  %636 = vmatpush1.msra.mxu0 %v20
  %637 = vmatprep.subr.mxu0 %v25
  %638 = vmatpush1.msra.mxu0 %v24
  %639 = vmatprep.subr.mxu0 %v29
  %640 = vmatpush1.msra.mxu0 %v28
  %641 = vmatprep.subr.mxu0 %v33
  %642 = vmatpush1.msra.mxu0 %v32
  %643 = vmatprep.subr.mxu0 %v37
  %644 = vmatpush1.msra.mxu0 %v36
  %645 = vmatprep.subr.mxu0 %v41
  %646 = vmatpush1.msra.mxu0 %v40
  %647 = vmatprep.subr.mxu0 %v45
  %648 = vmatpush1.msra.mxu0 %v44
  %649 = vmatprep.subr.mxu0 %v49
  %650 = vmatpush1.msra.mxu0 %v48
  %651 = vmatprep.subr.mxu0 %v53
  %652 = vmatpush1.msra.mxu0 %v52
  %653 = vmatprep.subr.mxu0 %v57
  %654 = vmatpush1.msra.mxu0 %v56
  %655 = vmatprep.subr.mxu0 %v61
  %656 = vmatpush1.msra.mxu0 %v60
  %657 = vmatprep.subr.mxu0 %v65
  %658 = vmatpush1.msra.mxu0 %v64
  %659 = vmatprep.subr.mxu0 %v69
  %660 = vmatpush1.msra.mxu0 %v68
  %661 = vmatprep.subr.mxu0 %v73
  %662 = vmatpush1.msra.mxu0 %v72
  %663 = vmatprep.subr.mxu0 %v77
  %664 = vmatpush1.msra.mxu0 %v76
  %665 = vmatprep.subr.mxu0 %v81
  %666 = vmatpush1.msra.mxu0 %v80
  %667 = vmatprep.subr.mxu0 0.0
  %668 = vmatpush1.msra.mxu0 0.0
  %669 = vmatprep.subr.mxu0 0.0
  %670 = vmatpush1.msra.mxu0 0.0
  %671 = vmatprep.subr.mxu0 0.0
  %672 = vmatpush1.msra.mxu0 0.0
  %673 = vmatprep.subr.mxu0 0.0
  %674 = vmatpush1.msra.mxu0 0.0
  %675 = vmatprep.subr.mxu0 0.0
  %676 = vmatpush1.msra.mxu0 0.0
  %677 = vmatprep.subr.mxu0 0.0
  %678 = vmatpush1.msra.mxu0 0.0
  %679 = vmatprep.subr.mxu0 0.0
  %680 = vmatpush1.msra.mxu0 0.0
  %681 = vmatprep.subr.mxu0 0.0
  %682 = vmatpush1.msra.mxu0 0.0
  %683 = vmatprep.subr.mxu0 0.0
  %684 = vmatpush1.msra.mxu0 0.0
  %685 = vmatprep.subr.mxu0 0.0
  %686 = vmatpush1.msra.mxu0 0.0
  %687 = vmatprep.subr.mxu0 0.0
  %688 = vmatpush1.msra.mxu0 0.0
  %689 = vmatprep.subr.mxu0 0.0
  %690 = vmatpush1.msra.mxu0 0.0
  %691 = vmatprep.subr.mxu0 0.0
  %692 = vmatpush1.msra.mxu0 0.0
  %693 = vmatprep.subr.mxu0 0.0
  %694 = vmatpush1.msra.mxu0 0.0
  %695 = vmatprep.subr.mxu0 0.0
  %696 = vmatpush1.msra.mxu0 0.0
  %697 = vmatprep.subr.mxu0 0.0
  %698 = vmatpush1.msra.mxu0 0.0
  %699 = vmatprep.mubr.f32.mxu0 0.0
  %700 = vmatmul.mubr.f32.gmra.mrb[0].mxu0 %v627
  %v701 = vpop.f32.mrb[0].mxu0
  %v702 = vadd.f32 0.0, %v701
  %v703 = vpop.f32.mrb[0].mxu0
  %v704 = vadd.f32 0.0, %v703
  %705 = vdwg.mxu0
  %706 = vmatprep.subr.mxu0 %v23
  %707 = vmatpush1.msra.mxu0 %v22
  %708 = vmatprep.subr.mxu0 %v27
  %709 = vmatpush1.msra.mxu0 %v26
  %710 = vmatprep.subr.mxu0 %v31
  %711 = vmatpush1.msra.mxu0 %v30
  %712 = vmatprep.subr.mxu0 %v35
  %713 = vmatpush1.msra.mxu0 %v34
  %714 = vmatprep.subr.mxu0 %v39
  %715 = vmatpush1.msra.mxu0 %v38
  %716 = vmatprep.subr.mxu0 %v43
  %717 = vmatpush1.msra.mxu0 %v42
  %718 = vmatprep.subr.mxu0 %v47
  %719 = vmatpush1.msra.mxu0 %v46
  %720 = vmatprep.subr.mxu0 %v51
  %721 = vmatpush1.msra.mxu0 %v50
  %722 = vmatprep.subr.mxu0 %v55
  %723 = vmatpush1.msra.mxu0 %v54
  %724 = vmatprep.subr.mxu0 %v59
  %725 = vmatpush1.msra.mxu0 %v58
  %726 = vmatprep.subr.mxu0 %v63
  %727 = vmatpush1.msra.mxu0 %v62
  %728 = vmatprep.subr.mxu0 %v67
  %729 = vmatpush1.msra.mxu0 %v66
  %730 = vmatprep.subr.mxu0 %v71
  %731 = vmatpush1.msra.mxu0 %v70
  %732 = vmatprep.subr.mxu0 %v75
  %733 = vmatpush1.msra.mxu0 %v74
  %734 = vmatprep.subr.mxu0 %v79
  %735 = vmatpush1.msra.mxu0 %v78
  %736 = vmatprep.subr.mxu0 %v83
  %737 = vmatpush1.msra.mxu0 %v82
  %738 = vmatprep.subr.mxu0 0.0
  %739 = vmatpush1.msra.mxu0 0.0
  %740 = vmatprep.subr.mxu0 0.0
  %741 = vmatpush1.msra.mxu0 0.0
  %742 = vmatprep.subr.mxu0 0.0
  %743 = vmatpush1.msra.mxu0 0.0
  %744 = vmatprep.subr.mxu0 0.0
  %745 = vmatpush1.msra.mxu0 0.0
  %746 = vmatprep.subr.mxu0 0.0
  %747 = vmatpush1.msra.mxu0 0.0
  %748 = vmatprep.subr.mxu0 0.0
  %749 = vmatpush1.msra.mxu0 0.0
  %750 = vmatprep.subr.mxu0 0.0
  %751 = vmatpush1.msra.mxu0 0.0
  %752 = vmatprep.subr.mxu0 0.0
  %753 = vmatpush1.msra.mxu0 0.0
  %754 = vmatprep.subr.mxu0 0.0
  %755 = vmatpush1.msra.mxu0 0.0
  %756 = vmatprep.subr.mxu0 0.0
  %757 = vmatpush1.msra.mxu0 0.0
  %758 = vmatprep.subr.mxu0 0.0
  %759 = vmatpush1.msra.mxu0 0.0
  %760 = vmatprep.subr.mxu0 0.0
  %761 = vmatpush1.msra.mxu0 0.0
  %762 = vmatprep.subr.mxu0 0.0
  %763 = vmatpush1.msra.mxu0 0.0
  %764 = vmatprep.subr.mxu0 0.0
  %765 = vmatpush1.msra.mxu0 0.0
  %766 = vmatprep.subr.mxu0 0.0
  %767 = vmatpush1.msra.mxu0 0.0
  %768 = vmatprep.subr.mxu0 0.0
  %769 = vmatpush1.msra.mxu0 0.0
  %770 = vmatprep.mubr.f32.mxu0 0.0
  %771 = vmatmul.mubr.f32.gmra.mrb[0].mxu0 %v627
  %v772 = vpop.f32.mrb[0].mxu0
  %v773 = vadd.f32 0.0, %v772
  %v774 = vpop.f32.mrb[0].mxu0
  %v775 = vadd.f32 0.0, %v774
  %776 = vdwg.mxu0
  %v777 = vadd.f32 %v631, %v702
  %v778 = vadd.f32 %v632, %v704
  %v779 = vadd.f32 %v633, %v773
  %v780 = vadd.f32 %v634, %v775
  %v781 = vxor.u32 %v777, 2147483648
  %v782 = vxor.u32 %v778, 2147483648
  %v783 = vxor.u32 %v779, 2147483648
  %v784 = vxor.u32 %v780, 2147483648
  %v785 = vmul.f32 %v781, 1.442695
  %v786 = vpow.pop %v785
  %v787 = vmul.f32 %v782, 1.442695
  %v788 = vpow.pop %v787
  %v789 = vmul.f32 %v783, 1.442695
  %v790 = vpow.pop %v789
  %v791 = vmul.f32 %v784, 1.442695
  %v792 = vpow.pop %v791
  %v793 = vadd.f32 %v786, 1.0
  %v794 = vadd.f32 %v788, 1.0
  %v795 = vadd.f32 %v790, 1.0
  %v796 = vadd.f32 %v792, 1.0
  %v797 = vrcp.pop %v793
  %v798 = vmul.f32 1.0, %v797
  %v799 = vrcp.pop %v794
  %v800 = vmul.f32 1.0, %v799
  %v801 = vrcp.pop %v795
  %v802 = vmul.f32 1.0, %v801
  %v803 = vrcp.pop %v796
  %v804 = vmul.f32 1.0, %v803
  %v805 = vmul.f32 %v800, %v625
  %v806 = vmul.f32 %v798, %v802
  %v807 = vadd.f32 %v805, %v806
  %v808 = vtanh.pop %v807
  %v809 = vmul.f32 %v804, %v808
  %s810 = scalar_lea.vmem %s2, 24
  %811 = vst [vmem:[%s810] sm:$0xff] %v809
  %s812 = scalar_lea.vmem %s0, 128
  %v813 = vld [vmem:[%s812] sm:$0xff]
  %v814 = vld [vmem:[%s812 + $0x8] sm:$0xff]
  %v815 = vld [vmem:[%s812 + $0x10] sm:$0xff]
  %v816 = vld [vmem:[%s812 + $0x18] sm:$0xff]
  %817 = vmatprep.subr.mxu0 %v21
  %818 = vmatpush1.msra.mxu0 %v20
  %819 = vmatprep.subr.mxu0 %v25
  %820 = vmatpush1.msra.mxu0 %v24
  %821 = vmatprep.subr.mxu0 %v29
  %822 = vmatpush1.msra.mxu0 %v28
  %823 = vmatprep.subr.mxu0 %v33
  %824 = vmatpush1.msra.mxu0 %v32
  %825 = vmatprep.subr.mxu0 %v37
  %826 = vmatpush1.msra.mxu0 %v36
  %827 = vmatprep.subr.mxu0 %v41
  %828 = vmatpush1.msra.mxu0 %v40
  %829 = vmatprep.subr.mxu0 %v45
  %830 = vmatpush1.msra.mxu0 %v44
  %831 = vmatprep.subr.mxu0 %v49
  %832 = vmatpush1.msra.mxu0 %v48
  %833 = vmatprep.subr.mxu0 %v53
  %834 = vmatpush1.msra.mxu0 %v52
  %835 = vmatprep.subr.mxu0 %v57
  %836 = vmatpush1.msra.mxu0 %v56
  %837 = vmatprep.subr.mxu0 %v61
  %838 = vmatpush1.msra.mxu0 %v60
  %839 = vmatprep.subr.mxu0 %v65
  %840 = vmatpush1.msra.mxu0 %v64
  %841 = vmatprep.subr.mxu0 %v69
  %842 = vmatpush1.msra.mxu0 %v68
  %843 = vmatprep.subr.mxu0 %v73
  %844 = vmatpush1.msra.mxu0 %v72
  %845 = vmatprep.subr.mxu0 %v77
  %846 = vmatpush1.msra.mxu0 %v76
  %847 = vmatprep.subr.mxu0 %v81
  %848 = vmatpush1.msra.mxu0 %v80
  %849 = vmatprep.subr.mxu0 0.0
  %850 = vmatpush1.msra.mxu0 0.0
  %851 = vmatprep.subr.mxu0 0.0
  %852 = vmatpush1.msra.mxu0 0.0
  %853 = vmatprep.subr.mxu0 0.0
  %854 = vmatpush1.msra.mxu0 0.0
  %855 = vmatprep.subr.mxu0 0.0
  %856 = vmatpush1.msra.mxu0 0.0
  %857 = vmatprep.subr.mxu0 0.0
  %858 = vmatpush1.msra.mxu0 0.0
  %859 = vmatprep.subr.mxu0 0.0
  %860 = vmatpush1.msra.mxu0 0.0
  %861 = vmatprep.subr.mxu0 0.0
  %862 = vmatpush1.msra.mxu0 0.0
  %863 = vmatprep.subr.mxu0 0.0
  %864 = vmatpush1.msra.mxu0 0.0
  %865 = vmatprep.subr.mxu0 0.0
  %866 = vmatpush1.msra.mxu0 0.0
  %867 = vmatprep.subr.mxu0 0.0
  %868 = vmatpush1.msra.mxu0 0.0
  %869 = vmatprep.subr.mxu0 0.0
  %870 = vmatpush1.msra.mxu0 0.0
  %871 = vmatprep.subr.mxu0 0.0
  %872 = vmatpush1.msra.mxu0 0.0
  %873 = vmatprep.subr.mxu0 0.0
  %874 = vmatpush1.msra.mxu0 0.0
  %875 = vmatprep.subr.mxu0 0.0
  %876 = vmatpush1.msra.mxu0 0.0
  %877 = vmatprep.subr.mxu0 0.0
  %878 = vmatpush1.msra.mxu0 0.0
  %879 = vmatprep.subr.mxu0 0.0
  %880 = vmatpush1.msra.mxu0 0.0
  %881 = vmatprep.mubr.f32.mxu0 0.0
  %882 = vmatmul.mubr.f32.gmra.mrb[0].mxu0 %v809
  %v883 = vpop.f32.mrb[0].mxu0
  %v884 = vadd.f32 0.0, %v883
  %v885 = vpop.f32.mrb[0].mxu0
  %v886 = vadd.f32 0.0, %v885
  %887 = vdwg.mxu0
  %888 = vmatprep.subr.mxu0 %v23
  %889 = vmatpush1.msra.mxu0 %v22
  %890 = vmatprep.subr.mxu0 %v27
  %891 = vmatpush1.msra.mxu0 %v26
  %892 = vmatprep.subr.mxu0 %v31
  %893 = vmatpush1.msra.mxu0 %v30
  %894 = vmatprep.subr.mxu0 %v35
  %895 = vmatpush1.msra.mxu0 %v34
  %896 = vmatprep.subr.mxu0 %v39
  %897 = vmatpush1.msra.mxu0 %v38
  %898 = vmatprep.subr.mxu0 %v43
  %899 = vmatpush1.msra.mxu0 %v42
  %900 = vmatprep.subr.mxu0 %v47
  %901 = vmatpush1.msra.mxu0 %v46
  %902 = vmatprep.subr.mxu0 %v51
  %903 = vmatpush1.msra.mxu0 %v50
  %904 = vmatprep.subr.mxu0 %v55
  %905 = vmatpush1.msra.mxu0 %v54
  %906 = vmatprep.subr.mxu0 %v59
  %907 = vmatpush1.msra.mxu0 %v58
  %908 = vmatprep.subr.mxu0 %v63
  %909 = vmatpush1.msra.mxu0 %v62
  %910 = vmatprep.subr.mxu0 %v67
  %911 = vmatpush1.msra.mxu0 %v66
  %912 = vmatprep.subr.mxu0 %v71
  %913 = vmatpush1.msra.mxu0 %v70
  %914 = vmatprep.subr.mxu0 %v75
  %915 = vmatpush1.msra.mxu0 %v74
  %916 = vmatprep.subr.mxu0 %v79
  %917 = vmatpush1.msra.mxu0 %v78
  %918 = vmatprep.subr.mxu0 %v83
  %919 = vmatpush1.msra.mxu0 %v82
  %920 = vmatprep.subr.mxu0 0.0
  %921 = vmatpush1.msra.mxu0 0.0
  %922 = vmatprep.subr.mxu0 0.0
  %923 = vmatpush1.msra.mxu0 0.0
  %924 = vmatprep.subr.mxu0 0.0
  %925 = vmatpush1.msra.mxu0 0.0
  %926 = vmatprep.subr.mxu0 0.0
  %927 = vmatpush1.msra.mxu0 0.0
  %928 = vmatprep.subr.mxu0 0.0
  %929 = vmatpush1.msra.mxu0 0.0
  %930 = vmatprep.subr.mxu0 0.0
  %931 = vmatpush1.msra.mxu0 0.0
  %932 = vmatprep.subr.mxu0 0.0
  %933 = vmatpush1.msra.mxu0 0.0
  %934 = vmatprep.subr.mxu0 0.0
  %935 = vmatpush1.msra.mxu0 0.0
  %936 = vmatprep.subr.mxu0 0.0
  %937 = vmatpush1.msra.mxu0 0.0
  %938 = vmatprep.subr.mxu0 0.0
  %939 = vmatpush1.msra.mxu0 0.0
  %940 = vmatprep.subr.mxu0 0.0
  %941 = vmatpush1.msra.mxu0 0.0
  %942 = vmatprep.subr.mxu0 0.0
  %943 = vmatpush1.msra.mxu0 0.0
  %944 = vmatprep.subr.mxu0 0.0
  %945 = vmatpush1.msra.mxu0 0.0
  %946 = vmatprep.subr.mxu0 0.0
  %947 = vmatpush1.msra.mxu0 0.0
  %948 = vmatprep.subr.mxu0 0.0
  %949 = vmatpush1.msra.mxu0 0.0
  %950 = vmatprep.subr.mxu0 0.0
  %951 = vmatpush1.msra.mxu0 0.0
  %952 = vmatprep.mubr.f32.mxu0 0.0
  %953 = vmatmul.mubr.f32.gmra.mrb[0].mxu0 %v809
  %v954 = vpop.f32.mrb[0].mxu0
  %v955 = vadd.f32 0.0, %v954
  %v956 = vpop.f32.mrb[0].mxu0
  %v957 = vadd.f32 0.0, %v956
  %958 = vdwg.mxu0
  %v959 = vadd.f32 %v813, %v884
  %v960 = vadd.f32 %v814, %v886
  %v961 = vadd.f32 %v815, %v955
  %v962 = vadd.f32 %v816, %v957
  %v963 = vxor.u32 %v959, 2147483648
  %v964 = vxor.u32 %v960, 2147483648
  %v965 = vxor.u32 %v961, 2147483648
  %v966 = vxor.u32 %v962, 2147483648
  %v967 = vmul.f32 %v963, 1.442695
  %v968 = vpow.pop %v967
  %v969 = vmul.f32 %v964, 1.442695
  %v970 = vpow.pop %v969
  %v971 = vmul.f32 %v965, 1.442695
  %v972 = vpow.pop %v971
  %v973 = vmul.f32 %v966, 1.442695
  %v974 = vpow.pop %v973
  %v975 = vadd.f32 %v968, 1.0
  %v976 = vadd.f32 %v970, 1.0
  %v977 = vadd.f32 %v972, 1.0
  %v978 = vadd.f32 %v974, 1.0
  %v979 = vrcp.pop %v975
  %v980 = vmul.f32 1.0, %v979
  %v981 = vrcp.pop %v976
  %v982 = vmul.f32 1.0, %v981
  %v983 = vrcp.pop %v977
  %v984 = vmul.f32 1.0, %v983
  %v985 = vrcp.pop %v978
  %v986 = vmul.f32 1.0, %v985
  %v987 = vmul.f32 %v982, %v807
  %v988 = vmul.f32 %v980, %v984
  %v989 = vadd.f32 %v987, %v988
  %v990 = vtanh.pop %v989
  %v991 = vmul.f32 %v986, %v990
  %s992 = scalar_lea.vmem %s2, 32
  %993 = vst [vmem:[%s992] sm:$0xff] %v991
  %s994 = scalar_lea.vmem %s0, 160
  %v995 = vld [vmem:[%s994] sm:$0xff]
  %v996 = vld [vmem:[%s994 + $0x8] sm:$0xff]
  %v997 = vld [vmem:[%s994 + $0x10] sm:$0xff]
  %v998 = vld [vmem:[%s994 + $0x18] sm:$0xff]
  %999 = vmatprep.subr.mxu0 %v21
  %1000 = vmatpush1.msra.mxu0 %v20
  %1001 = vmatprep.subr.mxu0 %v25
  %1002 = vmatpush1.msra.mxu0 %v24
  %1003 = vmatprep.subr.mxu0 %v29
  %1004 = vmatpush1.msra.mxu0 %v28
  %1005 = vmatprep.subr.mxu0 %v33
  %1006 = vmatpush1.msra.mxu0 %v32
  %1007 = vmatprep.subr.mxu0 %v37
  %1008 = vmatpush1.msra.mxu0 %v36
  %1009 = vmatprep.subr.mxu0 %v41
  %1010 = vmatpush1.msra.mxu0 %v40
  %1011 = vmatprep.subr.mxu0 %v45
  %1012 = vmatpush1.msra.mxu0 %v44
  %1013 = vmatprep.subr.mxu0 %v49
  %1014 = vmatpush1.msra.mxu0 %v48
  %1015 = vmatprep.subr.mxu0 %v53
  %1016 = vmatpush1.msra.mxu0 %v52
  %1017 = vmatprep.subr.mxu0 %v57
  %1018 = vmatpush1.msra.mxu0 %v56
  %1019 = vmatprep.subr.mxu0 %v61
  %1020 = vmatpush1.msra.mxu0 %v60
  %1021 = vmatprep.subr.mxu0 %v65
  %1022 = vmatpush1.msra.mxu0 %v64
  %1023 = vmatprep.subr.mxu0 %v69
  %1024 = vmatpush1.msra.mxu0 %v68
  %1025 = vmatprep.subr.mxu0 %v73
  %1026 = vmatpush1.msra.mxu0 %v72
  %1027 = vmatprep.subr.mxu0 %v77
  %1028 = vmatpush1.msra.mxu0 %v76
  %1029 = vmatprep.subr.mxu0 %v81
  %1030 = vmatpush1.msra.mxu0 %v80
  %1031 = vmatprep.subr.mxu0 0.0
  %1032 = vmatpush1.msra.mxu0 0.0
  %1033 = vmatprep.subr.mxu0 0.0
  %1034 = vmatpush1.msra.mxu0 0.0
  %1035 = vmatprep.subr.mxu0 0.0
  %1036 = vmatpush1.msra.mxu0 0.0
  %1037 = vmatprep.subr.mxu0 0.0
  %1038 = vmatpush1.msra.mxu0 0.0
  %1039 = vmatprep.subr.mxu0 0.0
  %1040 = vmatpush1.msra.mxu0 0.0
  %1041 = vmatprep.subr.mxu0 0.0
  %1042 = vmatpush1.msra.mxu0 0.0
  %1043 = vmatprep.subr.mxu0 0.0
  %1044 = vmatpush1.msra.mxu0 0.0
  %1045 = vmatprep.subr.mxu0 0.0
  %1046 = vmatpush1.msra.mxu0 0.0
  %1047 = vmatprep.subr.mxu0 0.0
  %1048 = vmatpush1.msra.mxu0 0.0
  %1049 = vmatprep.subr.mxu0 0.0
  %1050 = vmatpush1.msra.mxu0 0.0
  %1051 = vmatprep.subr.mxu0 0.0
  %1052 = vmatpush1.msra.mxu0 0.0
  %1053 = vmatprep.subr.mxu0 0.0
  %1054 = vmatpush1.msra.mxu0 0.0
  %1055 = vmatprep.subr.mxu0 0.0
  %1056 = vmatpush1.msra.mxu0 0.0
  %1057 = vmatprep.subr.mxu0 0.0
  %1058 = vmatpush1.msra.mxu0 0.0
  %1059 = vmatprep.subr.mxu0 0.0
  %1060 = vmatpush1.msra.mxu0 0.0
  %1061 = vmatprep.subr.mxu0 0.0
  %1062 = vmatpush1.msra.mxu0 0.0
  %1063 = vmatprep.mubr.f32.mxu0 0.0
  %1064 = vmatmul.mubr.f32.gmra.mrb[0].mxu0 %v991
  %v1065 = vpop.f32.mrb[0].mxu0
  %v1066 = vadd.f32 0.0, %v1065
  %v1067 = vpop.f32.mrb[0].mxu0
  %v1068 = vadd.f32 0.0, %v1067
  %1069 = vdwg.mxu0
  %1070 = vmatprep.subr.mxu0 %v23
  %1071 = vmatpush1.msra.mxu0 %v22
  %1072 = vmatprep.subr.mxu0 %v27
  %1073 = vmatpush1.msra.mxu0 %v26
  %1074 = vmatprep.subr.mxu0 %v31
  %1075 = vmatpush1.msra.mxu0 %v30
  %1076 = vmatprep.subr.mxu0 %v35
  %1077 = vmatpush1.msra.mxu0 %v34
  %1078 = vmatprep.subr.mxu0 %v39
  %1079 = vmatpush1.msra.mxu0 %v38
  %1080 = vmatprep.subr.mxu0 %v43
  %1081 = vmatpush1.msra.mxu0 %v42
  %1082 = vmatprep.subr.mxu0 %v47
  %1083 = vmatpush1.msra.mxu0 %v46
  %1084 = vmatprep.subr.mxu0 %v51
  %1085 = vmatpush1.msra.mxu0 %v50
  %1086 = vmatprep.subr.mxu0 %v55
  %1087 = vmatpush1.msra.mxu0 %v54
  %1088 = vmatprep.subr.mxu0 %v59
  %1089 = vmatpush1.msra.mxu0 %v58
  %1090 = vmatprep.subr.mxu0 %v63
  %1091 = vmatpush1.msra.mxu0 %v62
  %1092 = vmatprep.subr.mxu0 %v67
  %1093 = vmatpush1.msra.mxu0 %v66
  %1094 = vmatprep.subr.mxu0 %v71
  %1095 = vmatpush1.msra.mxu0 %v70
  %1096 = vmatprep.subr.mxu0 %v75
  %1097 = vmatpush1.msra.mxu0 %v74
  %1098 = vmatprep.subr.mxu0 %v79
  %1099 = vmatpush1.msra.mxu0 %v78
  %1100 = vmatprep.subr.mxu0 %v83
  %1101 = vmatpush1.msra.mxu0 %v82
  %1102 = vmatprep.subr.mxu0 0.0
  %1103 = vmatpush1.msra.mxu0 0.0
  %1104 = vmatprep.subr.mxu0 0.0
  %1105 = vmatpush1.msra.mxu0 0.0
  %1106 = vmatprep.subr.mxu0 0.0
  %1107 = vmatpush1.msra.mxu0 0.0
  %1108 = vmatprep.subr.mxu0 0.0
  %1109 = vmatpush1.msra.mxu0 0.0
  %1110 = vmatprep.subr.mxu0 0.0
  %1111 = vmatpush1.msra.mxu0 0.0
  %1112 = vmatprep.subr.mxu0 0.0
  %1113 = vmatpush1.msra.mxu0 0.0
  %1114 = vmatprep.subr.mxu0 0.0
  %1115 = vmatpush1.msra.mxu0 0.0
  %1116 = vmatprep.subr.mxu0 0.0
  %1117 = vmatpush1.msra.mxu0 0.0
  %1118 = vmatprep.subr.mxu0 0.0
  %1119 = vmatpush1.msra.mxu0 0.0
  %1120 = vmatprep.subr.mxu0 0.0
  %1121 = vmatpush1.msra.mxu0 0.0
  %1122 = vmatprep.subr.mxu0 0.0
  %1123 = vmatpush1.msra.mxu0 0.0
  %1124 = vmatprep.subr.mxu0 0.0
  %1125 = vmatpush1.msra.mxu0 0.0
  %1126 = vmatprep.subr.mxu0 0.0
  %1127 = vmatpush1.msra.mxu0 0.0
  %1128 = vmatprep.subr.mxu0 0.0
  %1129 = vmatpush1.msra.mxu0 0.0
  %1130 = vmatprep.subr.mxu0 0.0
  %1131 = vmatpush1.msra.mxu0 0.0
  %1132 = vmatprep.subr.mxu0 0.0
  %1133 = vmatpush1.msra.mxu0 0.0
  %1134 = vmatprep.mubr.f32.mxu0 0.0
  %1135 = vmatmul.mubr.f32.gmra.mrb[0].mxu0 %v991
  %v1136 = vpop.f32.mrb[0].mxu0
  %v1137 = vadd.f32 0.0, %v1136
  %v1138 = vpop.f32.mrb[0].mxu0
  %v1139 = vadd.f32 0.0, %v1138
  %1140 = vdwg.mxu0
  %v1141 = vadd.f32 %v995, %v1066
  %v1142 = vadd.f32 %v996, %v1068
  %v1143 = vadd.f32 %v997, %v1137
  %v1144 = vadd.f32 %v998, %v1139
  %v1145 = vxor.u32 %v1141, 2147483648
  %v1146 = vxor.u32 %v1142, 2147483648
  %v1147 = vxor.u32 %v1143, 2147483648
  %v1148 = vxor.u32 %v1144, 2147483648
  %v1149 = vmul.f32 %v1145, 1.442695
  %v1150 = vpow.pop %v1149
  %v1151 = vmul.f32 %v1146, 1.442695
  %v1152 = vpow.pop %v1151
  %v1153 = vmul.f32 %v1147, 1.442695
  %v1154 = vpow.pop %v1153
  %v1155 = vmul.f32 %v1148, 1.442695
  %v1156 = vpow.pop %v1155
  %v1157 = vadd.f32 %v1150, 1.0
  %v1158 = vadd.f32 %v1152, 1.0
  %v1159 = vadd.f32 %v1154, 1.0
  %v1160 = vadd.f32 %v1156, 1.0
  %v1161 = vrcp.pop %v1157
  %v1162 = vmul.f32 1.0, %v1161
  %v1163 = vrcp.pop %v1158
  %v1164 = vmul.f32 1.0, %v1163
  %v1165 = vrcp.pop %v1159
  %v1166 = vmul.f32 1.0, %v1165
  %v1167 = vrcp.pop %v1160
  %v1168 = vmul.f32 1.0, %v1167
  %v1169 = vmul.f32 %v1164, %v989
  %v1170 = vmul.f32 %v1162, %v1166
  %v1171 = vadd.f32 %v1169, %v1170
  %v1172 = vtanh.pop %v1171
  %v1173 = vmul.f32 %v1168, %v1172
  %s1174 = scalar_lea.vmem %s2, 40
  %1175 = vst [vmem:[%s1174] sm:$0xff] %v1173
  %s1176 = scalar_lea.vmem %s0, 192
  %v1177 = vld [vmem:[%s1176] sm:$0xff]
  %v1178 = vld [vmem:[%s1176 + $0x8] sm:$0xff]
  %v1179 = vld [vmem:[%s1176 + $0x10] sm:$0xff]
  %v1180 = vld [vmem:[%s1176 + $0x18] sm:$0xff]
  %1181 = vmatprep.subr.mxu0 %v21
  %1182 = vmatpush1.msra.mxu0 %v20
  %1183 = vmatprep.subr.mxu0 %v25
  %1184 = vmatpush1.msra.mxu0 %v24
  %1185 = vmatprep.subr.mxu0 %v29
  %1186 = vmatpush1.msra.mxu0 %v28
  %1187 = vmatprep.subr.mxu0 %v33
  %1188 = vmatpush1.msra.mxu0 %v32
  %1189 = vmatprep.subr.mxu0 %v37
  %1190 = vmatpush1.msra.mxu0 %v36
  %1191 = vmatprep.subr.mxu0 %v41
  %1192 = vmatpush1.msra.mxu0 %v40
  %1193 = vmatprep.subr.mxu0 %v45
  %1194 = vmatpush1.msra.mxu0 %v44
  %1195 = vmatprep.subr.mxu0 %v49
  %1196 = vmatpush1.msra.mxu0 %v48
  %1197 = vmatprep.subr.mxu0 %v53
  %1198 = vmatpush1.msra.mxu0 %v52
  %1199 = vmatprep.subr.mxu0 %v57
  %1200 = vmatpush1.msra.mxu0 %v56
  %1201 = vmatprep.subr.mxu0 %v61
  %1202 = vmatpush1.msra.mxu0 %v60
  %1203 = vmatprep.subr.mxu0 %v65
  %1204 = vmatpush1.msra.mxu0 %v64
  %1205 = vmatprep.subr.mxu0 %v69
  %1206 = vmatpush1.msra.mxu0 %v68
  %1207 = vmatprep.subr.mxu0 %v73
  %1208 = vmatpush1.msra.mxu0 %v72
  %1209 = vmatprep.subr.mxu0 %v77
  %1210 = vmatpush1.msra.mxu0 %v76
  %1211 = vmatprep.subr.mxu0 %v81
  %1212 = vmatpush1.msra.mxu0 %v80
  %1213 = vmatprep.subr.mxu0 0.0
  %1214 = vmatpush1.msra.mxu0 0.0
  %1215 = vmatprep.subr.mxu0 0.0
  %1216 = vmatpush1.msra.mxu0 0.0
  %1217 = vmatprep.subr.mxu0 0.0
  %1218 = vmatpush1.msra.mxu0 0.0
  %1219 = vmatprep.subr.mxu0 0.0
  %1220 = vmatpush1.msra.mxu0 0.0
  %1221 = vmatprep.subr.mxu0 0.0
  %1222 = vmatpush1.msra.mxu0 0.0
  %1223 = vmatprep.subr.mxu0 0.0
  %1224 = vmatpush1.msra.mxu0 0.0
  %1225 = vmatprep.subr.mxu0 0.0
  %1226 = vmatpush1.msra.mxu0 0.0
  %1227 = vmatprep.subr.mxu0 0.0
  %1228 = vmatpush1.msra.mxu0 0.0
  %1229 = vmatprep.subr.mxu0 0.0
  %1230 = vmatpush1.msra.mxu0 0.0
  %1231 = vmatprep.subr.mxu0 0.0
  %1232 = vmatpush1.msra.mxu0 0.0
  %1233 = vmatprep.subr.mxu0 0.0
  %1234 = vmatpush1.msra.mxu0 0.0
  %1235 = vmatprep.subr.mxu0 0.0
  %1236 = vmatpush1.msra.mxu0 0.0
  %1237 = vmatprep.subr.mxu0 0.0
  %1238 = vmatpush1.msra.mxu0 0.0
  %1239 = vmatprep.subr.mxu0 0.0
  %1240 = vmatpush1.msra.mxu0 0.0
  %1241 = vmatprep.subr.mxu0 0.0
  %1242 = vmatpush1.msra.mxu0 0.0
  %1243 = vmatprep.subr.mxu0 0.0
  %1244 = vmatpush1.msra.mxu0 0.0
  %1245 = vmatprep.mubr.f32.mxu0 0.0
  %1246 = vmatmul.mubr.f32.gmra.mrb[0].mxu0 %v1173
  %v1247 = vpop.f32.mrb[0].mxu0
  %v1248 = vadd.f32 0.0, %v1247
  %v1249 = vpop.f32.mrb[0].mxu0
  %v1250 = vadd.f32 0.0, %v1249
  %1251 = vdwg.mxu0
  %1252 = vmatprep.subr.mxu0 %v23
  %1253 = vmatpush1.msra.mxu0 %v22
  %1254 = vmatprep.subr.mxu0 %v27
  %1255 = vmatpush1.msra.mxu0 %v26
  %1256 = vmatprep.subr.mxu0 %v31
  %1257 = vmatpush1.msra.mxu0 %v30
  %1258 = vmatprep.subr.mxu0 %v35
  %1259 = vmatpush1.msra.mxu0 %v34
  %1260 = vmatprep.subr.mxu0 %v39
  %1261 = vmatpush1.msra.mxu0 %v38
  %1262 = vmatprep.subr.mxu0 %v43
  %1263 = vmatpush1.msra.mxu0 %v42
  %1264 = vmatprep.subr.mxu0 %v47
  %1265 = vmatpush1.msra.mxu0 %v46
  %1266 = vmatprep.subr.mxu0 %v51
  %1267 = vmatpush1.msra.mxu0 %v50
  %1268 = vmatprep.subr.mxu0 %v55
  %1269 = vmatpush1.msra.mxu0 %v54
  %1270 = vmatprep.subr.mxu0 %v59
  %1271 = vmatpush1.msra.mxu0 %v58
  %1272 = vmatprep.subr.mxu0 %v63
  %1273 = vmatpush1.msra.mxu0 %v62
  %1274 = vmatprep.subr.mxu0 %v67
  %1275 = vmatpush1.msra.mxu0 %v66
  %1276 = vmatprep.subr.mxu0 %v71
  %1277 = vmatpush1.msra.mxu0 %v70
  %1278 = vmatprep.subr.mxu0 %v75
  %1279 = vmatpush1.msra.mxu0 %v74
  %1280 = vmatprep.subr.mxu0 %v79
  %1281 = vmatpush1.msra.mxu0 %v78
  %1282 = vmatprep.subr.mxu0 %v83
  %1283 = vmatpush1.msra.mxu0 %v82
  %1284 = vmatprep.subr.mxu0 0.0
  %1285 = vmatpush1.msra.mxu0 0.0
  %1286 = vmatprep.subr.mxu0 0.0
  %1287 = vmatpush1.msra.mxu0 0.0
  %1288 = vmatprep.subr.mxu0 0.0
  %1289 = vmatpush1.msra.mxu0 0.0
  %1290 = vmatprep.subr.mxu0 0.0
  %1291 = vmatpush1.msra.mxu0 0.0
  %1292 = vmatprep.subr.mxu0 0.0
  %1293 = vmatpush1.msra.mxu0 0.0
  %1294 = vmatprep.subr.mxu0 0.0
  %1295 = vmatpush1.msra.mxu0 0.0
  %1296 = vmatprep.subr.mxu0 0.0
  %1297 = vmatpush1.msra.mxu0 0.0
  %1298 = vmatprep.subr.mxu0 0.0
  %1299 = vmatpush1.msra.mxu0 0.0
  %1300 = vmatprep.subr.mxu0 0.0
  %1301 = vmatpush1.msra.mxu0 0.0
  %1302 = vmatprep.subr.mxu0 0.0
  %1303 = vmatpush1.msra.mxu0 0.0
  %1304 = vmatprep.subr.mxu0 0.0
  %1305 = vmatpush1.msra.mxu0 0.0
  %1306 = vmatprep.subr.mxu0 0.0
  %1307 = vmatpush1.msra.mxu0 0.0
  %1308 = vmatprep.subr.mxu0 0.0
  %1309 = vmatpush1.msra.mxu0 0.0
  %1310 = vmatprep.subr.mxu0 0.0
  %1311 = vmatpush1.msra.mxu0 0.0
  %1312 = vmatprep.subr.mxu0 0.0
  %1313 = vmatpush1.msra.mxu0 0.0
  %1314 = vmatprep.subr.mxu0 0.0
  %1315 = vmatpush1.msra.mxu0 0.0
  %1316 = vmatprep.mubr.f32.mxu0 0.0
  %1317 = vmatmul.mubr.f32.gmra.mrb[0].mxu0 %v1173
  %v1318 = vpop.f32.mrb[0].mxu0
  %v1319 = vadd.f32 0.0, %v1318
  %v1320 = vpop.f32.mrb[0].mxu0
  %v1321 = vadd.f32 0.0, %v1320
  %1322 = vdwg.mxu0
  %v1323 = vadd.f32 %v1177, %v1248
  %v1324 = vadd.f32 %v1178, %v1250
  %v1325 = vadd.f32 %v1179, %v1319
  %v1326 = vadd.f32 %v1180, %v1321
  %v1327 = vxor.u32 %v1323, 2147483648
  %v1328 = vxor.u32 %v1324, 2147483648
  %v1329 = vxor.u32 %v1325, 2147483648
  %v1330 = vxor.u32 %v1326, 2147483648
  %v1331 = vmul.f32 %v1327, 1.442695
  %v1332 = vpow.pop %v1331
  %v1333 = vmul.f32 %v1328, 1.442695
  %v1334 = vpow.pop %v1333
  %v1335 = vmul.f32 %v1329, 1.442695
  %v1336 = vpow.pop %v1335
  %v1337 = vmul.f32 %v1330, 1.442695
  %v1338 = vpow.pop %v1337
  %v1339 = vadd.f32 %v1332, 1.0
  %v1340 = vadd.f32 %v1334, 1.0
  %v1341 = vadd.f32 %v1336, 1.0
  %v1342 = vadd.f32 %v1338, 1.0
  %v1343 = vrcp.pop %v1339
  %v1344 = vmul.f32 1.0, %v1343
  %v1345 = vrcp.pop %v1340
  %v1346 = vmul.f32 1.0, %v1345
  %v1347 = vrcp.pop %v1341
  %v1348 = vmul.f32 1.0, %v1347
  %v1349 = vrcp.pop %v1342
  %v1350 = vmul.f32 1.0, %v1349
  %v1351 = vmul.f32 %v1346, %v1171
  %v1352 = vmul.f32 %v1344, %v1348
  %v1353 = vadd.f32 %v1351, %v1352
  %v1354 = vtanh.pop %v1353
  %v1355 = vmul.f32 %v1350, %v1354
  %s1356 = scalar_lea.vmem %s2, 48
  %1357 = vst [vmem:[%s1356] sm:$0xff] %v1355
  %s1358 = scalar_lea.vmem %s0, 224
  %v1359 = vld [vmem:[%s1358] sm:$0xff]
  %v1360 = vld [vmem:[%s1358 + $0x8] sm:$0xff]
  %v1361 = vld [vmem:[%s1358 + $0x10] sm:$0xff]
  %v1362 = vld [vmem:[%s1358 + $0x18] sm:$0xff]
  %1363 = vmatprep.subr.mxu0 %v21
  %1364 = vmatpush1.msra.mxu0 %v20
  %1365 = vmatprep.subr.mxu0 %v25
  %1366 = vmatpush1.msra.mxu0 %v24
  %1367 = vmatprep.subr.mxu0 %v29
  %1368 = vmatpush1.msra.mxu0 %v28
  %1369 = vmatprep.subr.mxu0 %v33
  %1370 = vmatpush1.msra.mxu0 %v32
  %1371 = vmatprep.subr.mxu0 %v37
  %1372 = vmatpush1.msra.mxu0 %v36
  %1373 = vmatprep.subr.mxu0 %v41
  %1374 = vmatpush1.msra.mxu0 %v40
  %1375 = vmatprep.subr.mxu0 %v45
  %1376 = vmatpush1.msra.mxu0 %v44
  %1377 = vmatprep.subr.mxu0 %v49
  %1378 = vmatpush1.msra.mxu0 %v48
  %1379 = vmatprep.subr.mxu0 %v53
  %1380 = vmatpush1.msra.mxu0 %v52
  %1381 = vmatprep.subr.mxu0 %v57
  %1382 = vmatpush1.msra.mxu0 %v56
  %1383 = vmatprep.subr.mxu0 %v61
  %1384 = vmatpush1.msra.mxu0 %v60
  %1385 = vmatprep.subr.mxu0 %v65
  %1386 = vmatpush1.msra.mxu0 %v64
  %1387 = vmatprep.subr.mxu0 %v69
  %1388 = vmatpush1.msra.mxu0 %v68
  %1389 = vmatprep.subr.mxu0 %v73
  %1390 = vmatpush1.msra.mxu0 %v72
  %1391 = vmatprep.subr.mxu0 %v77
  %1392 = vmatpush1.msra.mxu0 %v76
  %1393 = vmatprep.subr.mxu0 %v81
  %1394 = vmatpush1.msra.mxu0 %v80
  %1395 = vmatprep.subr.mxu0 0.0
  %1396 = vmatpush1.msra.mxu0 0.0
  %1397 = vmatprep.subr.mxu0 0.0
  %1398 = vmatpush1.msra.mxu0 0.0
  %1399 = vmatprep.subr.mxu0 0.0
  %1400 = vmatpush1.msra.mxu0 0.0
  %1401 = vmatprep.subr.mxu0 0.0
  %1402 = vmatpush1.msra.mxu0 0.0
  %1403 = vmatprep.subr.mxu0 0.0
  %1404 = vmatpush1.msra.mxu0 0.0
  %1405 = vmatprep.subr.mxu0 0.0
  %1406 = vmatpush1.msra.mxu0 0.0
  %1407 = vmatprep.subr.mxu0 0.0
  %1408 = vmatpush1.msra.mxu0 0.0
  %1409 = vmatprep.subr.mxu0 0.0
  %1410 = vmatpush1.msra.mxu0 0.0
  %1411 = vmatprep.subr.mxu0 0.0
  %1412 = vmatpush1.msra.mxu0 0.0
  %1413 = vmatprep.subr.mxu0 0.0
  %1414 = vmatpush1.msra.mxu0 0.0
  %1415 = vmatprep.subr.mxu0 0.0
  %1416 = vmatpush1.msra.mxu0 0.0
  %1417 = vmatprep.subr.mxu0 0.0
  %1418 = vmatpush1.msra.mxu0 0.0
  %1419 = vmatprep.subr.mxu0 0.0
  %1420 = vmatpush1.msra.mxu0 0.0
  %1421 = vmatprep.subr.mxu0 0.0
  %1422 = vmatpush1.msra.mxu0 0.0
  %1423 = vmatprep.subr.mxu0 0.0
  %1424 = vmatpush1.msra.mxu0 0.0
  %1425 = vmatprep.subr.mxu0 0.0
  %1426 = vmatpush1.msra.mxu0 0.0
  %1427 = vmatprep.mubr.f32.mxu0 0.0
  %1428 = vmatmul.mubr.f32.gmra.mrb[0].mxu0 %v1355
  %v1429 = vpop.f32.mrb[0].mxu0
  %v1430 = vadd.f32 0.0, %v1429
  %v1431 = vpop.f32.mrb[0].mxu0
  %v1432 = vadd.f32 0.0, %v1431
  %1433 = vdwg.mxu0
  %1434 = vmatprep.subr.mxu0 %v23
  %1435 = vmatpush1.msra.mxu0 %v22
  %1436 = vmatprep.subr.mxu0 %v27
  %1437 = vmatpush1.msra.mxu0 %v26
  %1438 = vmatprep.subr.mxu0 %v31
  %1439 = vmatpush1.msra.mxu0 %v30
  %1440 = vmatprep.subr.mxu0 %v35
  %1441 = vmatpush1.msra.mxu0 %v34
  %1442 = vmatprep.subr.mxu0 %v39
  %1443 = vmatpush1.msra.mxu0 %v38
  %1444 = vmatprep.subr.mxu0 %v43
  %1445 = vmatpush1.msra.mxu0 %v42
  %1446 = vmatprep.subr.mxu0 %v47
  %1447 = vmatpush1.msra.mxu0 %v46
  %1448 = vmatprep.subr.mxu0 %v51
  %1449 = vmatpush1.msra.mxu0 %v50
  %1450 = vmatprep.subr.mxu0 %v55
  %1451 = vmatpush1.msra.mxu0 %v54
  %1452 = vmatprep.subr.mxu0 %v59
  %1453 = vmatpush1.msra.mxu0 %v58
  %1454 = vmatprep.subr.mxu0 %v63
  %1455 = vmatpush1.msra.mxu0 %v62
  %1456 = vmatprep.subr.mxu0 %v67
  %1457 = vmatpush1.msra.mxu0 %v66
  %1458 = vmatprep.subr.mxu0 %v71
  %1459 = vmatpush1.msra.mxu0 %v70
  %1460 = vmatprep.subr.mxu0 %v75
  %1461 = vmatpush1.msra.mxu0 %v74
  %1462 = vmatprep.subr.mxu0 %v79
  %1463 = vmatpush1.msra.mxu0 %v78
  %1464 = vmatprep.subr.mxu0 %v83
  %1465 = vmatpush1.msra.mxu0 %v82
  %1466 = vmatprep.subr.mxu0 0.0
  %1467 = vmatpush1.msra.mxu0 0.0
  %1468 = vmatprep.subr.mxu0 0.0
  %1469 = vmatpush1.msra.mxu0 0.0
  %1470 = vmatprep.subr.mxu0 0.0
  %1471 = vmatpush1.msra.mxu0 0.0
  %1472 = vmatprep.subr.mxu0 0.0
  %1473 = vmatpush1.msra.mxu0 0.0
  %1474 = vmatprep.subr.mxu0 0.0
  %1475 = vmatpush1.msra.mxu0 0.0
  %1476 = vmatprep.subr.mxu0 0.0
  %1477 = vmatpush1.msra.mxu0 0.0
  %1478 = vmatprep.subr.mxu0 0.0
  %1479 = vmatpush1.msra.mxu0 0.0
  %1480 = vmatprep.subr.mxu0 0.0
  %1481 = vmatpush1.msra.mxu0 0.0
  %1482 = vmatprep.subr.mxu0 0.0
  %1483 = vmatpush1.msra.mxu0 0.0
  %1484 = vmatprep.subr.mxu0 0.0
  %1485 = vmatpush1.msra.mxu0 0.0
  %1486 = vmatprep.subr.mxu0 0.0
  %1487 = vmatpush1.msra.mxu0 0.0
  %1488 = vmatprep.subr.mxu0 0.0
  %1489 = vmatpush1.msra.mxu0 0.0
  %1490 = vmatprep.subr.mxu0 0.0
  %1491 = vmatpush1.msra.mxu0 0.0
  %1492 = vmatprep.subr.mxu0 0.0
  %1493 = vmatpush1.msra.mxu0 0.0
  %1494 = vmatprep.subr.mxu0 0.0
  %1495 = vmatpush1.msra.mxu0 0.0
  %1496 = vmatprep.subr.mxu0 0.0
  %1497 = vmatpush1.msra.mxu0 0.0
  %1498 = vmatprep.mubr.f32.mxu0 0.0
  %1499 = vmatmul.mubr.f32.gmra.mrb[0].mxu0 %v1355
  %v1500 = vpop.f32.mrb[0].mxu0
  %v1501 = vadd.f32 0.0, %v1500
  %v1502 = vpop.f32.mrb[0].mxu0
  %v1503 = vadd.f32 0.0, %v1502
  %1504 = vdwg.mxu0
  %v1505 = vadd.f32 %v1359, %v1430
  %v1506 = vadd.f32 %v1360, %v1432
  %v1507 = vadd.f32 %v1361, %v1501
  %v1508 = vadd.f32 %v1362, %v1503
  %v1509 = vxor.u32 %v1505, 2147483648
  %v1510 = vxor.u32 %v1506, 2147483648
  %v1511 = vxor.u32 %v1507, 2147483648
  %v1512 = vxor.u32 %v1508, 2147483648
  %v1513 = vmul.f32 %v1509, 1.442695
  %v1514 = vpow.pop %v1513
  %v1515 = vmul.f32 %v1510, 1.442695
  %v1516 = vpow.pop %v1515
  %v1517 = vmul.f32 %v1511, 1.442695
  %v1518 = vpow.pop %v1517
  %v1519 = vmul.f32 %v1512, 1.442695
  %v1520 = vpow.pop %v1519
  %v1521 = vadd.f32 %v1514, 1.0
  %v1522 = vadd.f32 %v1516, 1.0
  %v1523 = vadd.f32 %v1518, 1.0
  %v1524 = vadd.f32 %v1520, 1.0
  %v1525 = vrcp.pop %v1521
  %v1526 = vmul.f32 1.0, %v1525
  %v1527 = vrcp.pop %v1522
  %v1528 = vmul.f32 1.0, %v1527
  %v1529 = vrcp.pop %v1523
  %v1530 = vmul.f32 1.0, %v1529
  %v1531 = vrcp.pop %v1524
  %v1532 = vmul.f32 1.0, %v1531
  %v1533 = vmul.f32 %v1528, %v1353
  %v1534 = vmul.f32 %v1526, %v1530
  %v1535 = vadd.f32 %v1533, %v1534
  %v1536 = vtanh.pop %v1535
  %v1537 = vmul.f32 %v1532, %v1536
  %s1538 = scalar_lea.vmem %s2, 56
  %1539 = vst [vmem:[%s1538] sm:$0xff] %v1537
  %1540 = vst [vmem:[#allocation2] sm:$0xff] %v1537
  %1541 = vst [vmem:[#allocation3] sm:$0xff] %v1535
  // Predicated region
  $region14: #{custom_lstm.1} parent=0 // pred_check
    %p1542 = pneg %p14
  $region15: #{custom_lstm.1} parent=0 // pred_check_branch
    %1544 = sbr.rel (%p1542) target = $region17
  $region16: #{custom_lstm.1} parent=0 // pred_region
    %1545 = vst [vmem:[%s3] sm:$0xff] %v1537
    %1546 = vst [vmem:[%s4] sm:$0xff] %v1535
  $region17: #{custom_lstm.1} parent=0 // pred_fallthru
    _
  // Predicated region
  $region18: #{custom_lstm.1} parent=0 // pred_check
    _
  $region19: #{custom_lstm.1} parent=0 // pred_check_branch
    %1548 = sbr.rel (0) target = $region21
  $region20: #{custom_lstm.1} parent=0 // pred_region
    _
  $region21: #{custom_lstm.1} parent=0 // pred_fallthru
    _
  // Predicated region
  $region22: #{custom_lstm.1} parent=0 // pred_check
    _
  $region23: #{custom_lstm.1} parent=0 // pred_check_branch
    %1550 = sbr.rel (0) target = $region25
  $region24: #{custom_lstm.1} parent=0 // pred_region
    _
  $region25: #{custom_lstm.1} parent=0 // pred_fallthru
    _
  // Predicated region
  $region26: #{custom_lstm.1} parent=0 // pred_check
    _
  $region27: #{custom_lstm.1} parent=0 // pred_check_branch
    %1552 = sbr.rel (0) target = $region29
  $region28: #{custom_lstm.1} parent=0 // pred_region
    _
  $region29: #{custom_lstm.1} parent=0 // pred_fallthru
    _
  // Predicated region
  $region30: #{custom_lstm.1} parent=0 // pred_check
    _
  $region31: #{custom_lstm.1} parent=0 // pred_check_branch
    %1554 = sbr.rel (0) target = $region33
  $region32: #{custom_lstm.1} parent=0 // pred_region
    _
  $region33: #{custom_lstm.1} parent=0 // pred_fallthru
    _
  // Predicated region
  $region34: #{custom_lstm.1} parent=0 // pred_check
    _
  $region35: #{custom_lstm.1} parent=0 // pred_check_branch
    %1556 = sbr.rel (0) target = $region37
  $region36: #{custom_lstm.1} parent=0 // pred_region
    _
  $region37: #{custom_lstm.1} parent=0 // pred_fallthru
    _
  // Predicated region
  $region38: #{custom_lstm.1} parent=0 // pred_check
    _
  $region39: #{custom_lstm.1} parent=0 // pred_check_branch
    %1558 = sbr.rel (0) target = $region41
  $region40: #{custom_lstm.1} parent=0 // pred_region
    _
  $region41: #{custom_lstm.1} parent=0 // pred_fallthru
    _

</llo_original>
